<compile_context>
chip_gen: v6e
topology: v6e:2x2x1
jax: 0.10.0
libtpu: 0.0.40
codegen_flags: <defaults>
</compile_context>

<pallas_src>
import functools

import jax
import jax.numpy as jnp
from jax import lax
from jax.experimental import pallas as pl
from jax.experimental.pallas import tpu as pltpu


def _round_up(x, m):
    return (x + m - 1) // m * m


def _permute_gates(p, H):
    """Reorder the leading 4H gate axis from PyTorch order (i, f, g, o) to (i, f, o, g)."""
    i, f, g, o = p[0 * H:1 * H], p[1 * H:2 * H], p[2 * H:3 * H], p[3 * H:4 * H]
    return jnp.concatenate([i, f, o, g], axis=0)


# ---------------------------------------------------------------------------
# Fused Pallas kernel: 2-layer LSTM recurrence + final FC, time loop in-body.
# ---------------------------------------------------------------------------
def _char_lstm_kernel(xp1_ref,      # (T, B, 4H) f32   precomputed x @ W_ih1^T + b1 (gate order i,f,o,g)
                      w1hh_ref,     # (H, 4H)    compute dtype
                      w2ih_ref,     # (H, 4H)    compute dtype
                      w2hh_ref,     # (H, 4H)    compute dtype
                      b2_ref,       # (1, 4H)    f32
                      wfc_ref,      # (H, Vp)    compute dtype
                      bfc_ref,      # (1, Vp)    f32
                      logits_ref,   # (B, Vp)    f32
                      hn_ref,       # (B, H)     f32   layer-2 final h
                      cn_ref,       # (B, H)     f32   layer-2 final c
                      *, seq_len, hidden_dim, compute_dtype):
    H = hidden_dim
    B = hn_ref.shape[0]

    # Weights are resident in VMEM; hoist the loads out of the time loop.
    w1hh = w1hh_ref[...]
    w2ih = w2ih_ref[...]
    w2hh = w2hh_ref[...]
    b2 = b2_ref[...]

    def gate_math(gates, c_prev):
        # Gate order after glue permutation: (i, f, o, g).
        sig = jax.nn.sigmoid(gates[:, :3 * H])      # single EUP pass over i, f, o
        i_g = sig[:, 0 * H:1 * H]
        f_g = sig[:, 1 * H:2 * H]
        o_g = sig[:, 2 * H:3 * H]
        g_g = jnp.tanh(gates[:, 3 * H:4 * H])
        c_new = f_g * c_prev + i_g * g_g
        h_new = o_g * jnp.tanh(c_new)
        return h_new, c_new

    def step(t, carry):
        h1, c1, h2, c2 = carry
        # Layer 1: input projection was hoisted; only the recurrent matmul stays here.
        gates1 = xp1_ref[t] + jnp.dot(h1.astype(compute_dtype), w1hh,
                                      preferred_element_type=jnp.float32)
        h1, c1 = gate_math(gates1, c1)
        # Layer 2: fed directly from layer 1's new hidden state (never touches HBM).
        gates2 = (jnp.dot(h1.astype(compute_dtype), w2ih,
                          preferred_element_type=jnp.float32)
                  + jnp.dot(h2.astype(compute_dtype), w2hh,
                            preferred_element_type=jnp.float32)
                  + b2)
        h2, c2 = gate_math(gates2, c2)
        return h1, c1, h2, c2

    zeros = jnp.zeros((B, H), jnp.float32)
    _, _, h2, c2 = lax.fori_loop(0, seq_len, step, (zeros, zeros, zeros, zeros))

    # Single store each: final states + fused FC on the last timestep only.
    hn_ref[...] = h2
    cn_ref[...] = c2
    logits_ref[...] = (jnp.dot(h2.astype(compute_dtype), wfc_ref[...],
                               preferred_element_type=jnp.float32)
                       + bfc_ref[...])


# ---------------------------------------------------------------------------
# Model wrapper
# ---------------------------------------------------------------------------
class CharLSTMPallas:
    """JAX/Pallas re-implementation of the PyTorch CharLSTM forward pass."""

    def __init__(self, vocab_size=70, embedding_size=8, lstm_hidden_dim=256,
                 seq_length=80, compute_dtype=jnp.bfloat16,
                 key=jax.random.PRNGKey(0)):
        self.vocab_size = vocab_size
        self.embedding_size = embedding_size
        self.lstm_hidden_dim = lstm_hidden_dim
        self.seq_length = seq_length
        self.compute_dtype = compute_dtype

        keys = jax.random.split(key, 11)
        H, E, V = lstm_hidden_dim, embedding_size, vocab_size
        s = 1.0 / jnp.sqrt(jnp.float32(H))

        def u(k, shape, scale):
            return jax.random.uniform(k, shape, jnp.float32, -scale, scale)

        # nn.Embedding: N(0, 1)
        self.embedding = jax.random.normal(keys[0], (V, E), jnp.float32)
        # nn.LSTM params (PyTorch shapes, gate order i,f,g,o), U(-1/sqrt(H), 1/sqrt(H))
        self.l1_w_ih = u(keys[1], (4 * H, E), s)
        self.l1_w_hh = u(keys[2], (4 * H, H), s)
        self.l1_b_ih = u(keys[3], (4 * H,), s)
        self.l1_b_hh = u(keys[4], (4 * H,), s)
        self.l2_w_ih = u(keys[5], (4 * H, H), s)
        self.l2_w_hh = u(keys[6], (4 * H, H), s)
        self.l2_b_ih = u(keys[7], (4 * H,), s)
        self.l2_b_hh = u(keys[8], (4 * H,), s)
        # nn.Linear
        self.fc_w = u(keys[9], (V, H), s)
        self.fc_b = u(keys[10], (V,), s)

        self._prepare_kernel_params()

    def _prepare_kernel_params(self):
        """Pre-transpose / permute / pad parameters into the kernel layout (glue only)."""
        H, V = self.lstm_hidden_dim, self.vocab_size
        cd = self.compute_dtype

        # Layer 1 (input projection hoisted to glue, so keep W_ih^T here too).
        self._w1_ih_t = jnp.transpose(_permute_gates(self.l1_w_ih, H)).astype(cd)   # (E, 4H)
        self._b1 = _permute_gates(self.l1_b_ih + self.l1_b_hh, H)[None, :].astype(jnp.float32)
        self._w1_hh_t = jnp.transpose(_permute_gates(self.l1_w_hh, H)).astype(cd)   # (H, 4H)
        # Layer 2
        self._w2_ih_t = jnp.transpose(_permute_gates(self.l2_w_ih, H)).astype(cd)   # (H, 4H)
        self._w2_hh_t = jnp.transpose(_permute_gates(self.l2_w_hh, H)).astype(cd)   # (H, 4H)
        self._b2 = _permute_gates(self.l2_b_ih + self.l2_b_hh, H)[None, :].astype(jnp.float32)
        # FC padded to a lane-dense output width (multiple of 128); sliced back in glue.
        Vp = _round_up(V, 128)
        w_pad = jnp.zeros((Vp, H), jnp.float32).at[:V].set(self.fc_w)
        b_pad = jnp.zeros((Vp,), jnp.float32).at[:V].set(self.fc_b)
        self._wfc_t = jnp.transpose(w_pad).astype(cd)      # (H, Vp)
        self._bfc = b_pad[None, :].astype(jnp.float32)     # (1, Vp)
        self._v_padded = Vp

    def init_hidden(self, batch_size):
        H = self.lstm_hidden_dim
        return (jnp.zeros((2, batch_size, H), jnp.float32),
                jnp.zeros((2, batch_size, H), jnp.float32))

    def forward(self, x_tokens, hidden):
        """x_tokens: int32 (B, T).  `hidden` accepted for parity but, as in the PyTorch
        module, is not fed into the LSTMs (they start from zeros)."""
        del hidden  # matches PyTorch semantics: lstm called without initial state
        cd = self.compute_dtype
        B, T = x_tokens.shape
        H = self.lstm_hidden_dim
        Vp = self._v_padded

        # Glue: embedding gather + hoisted layer-1 input projection for ALL timesteps
        # (one batched matmul, no recurrence dependency -> off the serial critical path).
        # TODO(synk): embedding gather stays in XLA glue; a DMA-gather kernel buys nothing here.
        x_emb = jnp.take(self.embedding, x_tokens, axis=0)          # (B, T, E)
        x_tm = jnp.transpose(x_emb, (1, 0, 2))                      # (T, B, E) time-major
        xp1 = jnp.einsum('tbe,ef->tbf', x_tm.astype(cd), self._w1_ih_t,
                         preferred_element_type=jnp.float32) + self._b1   # (T, B, 4H) f32

        kernel = functools.partial(_char_lstm_kernel, seq_len=T,
                                   hidden_dim=H, compute_dtype=cd)
        logits_pad, h_n, c_n = pl.pallas_call(
            kernel,
            out_shape=(
                jax.ShapeDtypeStruct((B, Vp), jnp.float32),
                jax.ShapeDtypeStruct((B, H), jnp.float32),
                jax.ShapeDtypeStruct((B, H), jnp.float32),
            ),
            compiler_params=pltpu.CompilerParams(
                vmem_limit_bytes=32 * 1024 * 1024),   # everything stays VMEM-resident
        )(xp1, self._w1_hh_t, self._w2_ih_t, self._w2_hh_t, self._b2,
          self._wfc_t, self._bfc)

        logits = logits_pad[:, :self.vocab_size]                    # (B, V)
        hidden_out = (h_n[None, :, :], c_n[None, :, :])             # (1, B, H) each (lstm2)
        return logits, hidden_out


# ---------------------------------------------------------------------------
# Pure-JAX reference (mirrors the bf16 matmul-operand rounding for a tight check)
# ---------------------------------------------------------------------------
def _ref_lstm(x_tm, w_ih, w_hh, b_ih, b_hh, compute_dtype):
    H = w_hh.shape[1]
    w_ih_t = jnp.transpose(w_ih).astype(compute_dtype)
    w_hh_t = jnp.transpose(w_hh).astype(compute_dtype)
    b = (b_ih + b_hh).astype(jnp.float32)

    def step(carry, x_t):
        h, c = carry
        gates = (jnp.dot(x_t.astype(compute_dtype), w_ih_t,
                         preferred_element_type=jnp.float32)
                 + jnp.dot(h.astype(compute_dtype), w_hh_t,
                           preferred_element_type=jnp.float32)
                 + b)
        i = jax.nn.sigmoid(gates[:, 0 * H:1 * H])
        f = jax.nn.sigmoid(gates[:, 1 * H:2 * H])
        g = jnp.tanh(gates[:, 2 * H:3 * H])
        o = jax.nn.sigmoid(gates[:, 3 * H:4 * H])
        c = f * c + i * g
        h = o * jnp.tanh(c)
        return (h, c), h

    B = x_tm.shape[1]
    init = (jnp.zeros((B, H), jnp.float32), jnp.zeros((B, H), jnp.float32))
    (h_n, c_n), h_seq = lax.scan(step, init, x_tm)
    return h_seq, h_n, c_n


def _ref_forward(model, x_tokens):
    cd = model.compute_dtype
    x_emb = jnp.take(model.embedding, x_tokens, axis=0)
    x_tm = jnp.transpose(x_emb, (1, 0, 2)).astype(jnp.float32)
    h1, _, _ = _ref_lstm(x_tm, model.l1_w_ih, model.l1_w_hh,
                         model.l1_b_ih, model.l1_b_hh, cd)
    h2, h_n, c_n = _ref_lstm(h1, model.l2_w_ih, model.l2_w_hh,
                             model.l2_b_ih, model.l2_b_hh, cd)
    logits = (jnp.dot(h2[-1].astype(cd), jnp.transpose(model.fc_w).astype(cd),
                      preferred_element_type=jnp.float32)
              + model.fc_b.astype(jnp.float32))
    return logits, (h_n[None], c_n[None])


# ---------------------------------------------------------------------------
if __name__ == "__main__":
    # Module defaults (lane-dense H, avoids the sub-128 layout hazard flagged in review).
    B = 2
    V, E, H, T = 70, 8, 256, 80
    key = jax.random.PRNGKey(0)
    k_tok, k_model = jax.random.split(key)

    model = CharLSTMPallas(vocab_size=V, embedding_size=E, lstm_hidden_dim=H,
                           seq_length=T, compute_dtype=jnp.bfloat16, key=k_model)

    x = jax.random.randint(k_tok, (B, T), 0, V, dtype=jnp.int32)
    hidden0 = model.init_hidden(B)

    logits, (h_n, c_n) = model.forward(x, hidden0)
    jax.block_until_ready((logits, h_n, c_n))

    # Correctness vs pure-JAX reference (reference applies the same bf16 operand rounding,
    # so tolerances stay tight while still catching gate-order / permutation bugs).
    ref_logits, (ref_h, ref_c) = _ref_forward(model, x)
    assert logits.shape == (B, V)
    assert h_n.shape == (1, B, H) and c_n.shape == (1, B, H)
    assert jnp.allclose(logits, ref_logits, atol=5e-3, rtol=5e-3), \
        float(jnp.max(jnp.abs(logits - ref_logits)))
    assert jnp.allclose(h_n, ref_h, atol=5e-3, rtol=5e-3)
    assert jnp.allclose(c_n, ref_c, atol=5e-3, rtol=5e-3)

    print("KERNEL_OK")
</pallas_src>

<mosaic_0001>
module attributes {stable_mosaic.version = 11 : i64} {
  func.func @_char_lstm_kernel(%arg0: memref<80x2x1024xf32, #tpu.memory_space<vmem>>, %arg1: memref<256x1024xbf16, #tpu.memory_space<vmem>>, %arg2: memref<256x1024xbf16, #tpu.memory_space<vmem>>, %arg3: memref<256x1024xbf16, #tpu.memory_space<vmem>>, %arg4: memref<1x1024xf32, #tpu.memory_space<vmem>>, %arg5: memref<256x128xbf16, #tpu.memory_space<vmem>>, %arg6: memref<1x128xf32, #tpu.memory_space<vmem>>, %arg7: memref<2x128xf32, #tpu.memory_space<vmem>>, %arg8: memref<2x256xf32, #tpu.memory_space<vmem>>, %arg9: memref<2x256xf32, #tpu.memory_space<vmem>>) attributes {dimension_semantics = [], scalar_prefetch = 0 : i64, scratch_operands = 0 : i64, tpu.core_type = #tpu.core_type<tc>} {
    %c0 = arith.constant 0 : index
    %c0_0 = arith.constant 0 : index
    %0 = vector.load %arg1[%c0, %c0_0] : memref<256x1024xbf16, #tpu.memory_space<vmem>>, vector<256x1024xbf16>
    %c0_1 = arith.constant 0 : index
    %c0_2 = arith.constant 0 : index
    %1 = vector.load %arg2[%c0_1, %c0_2] : memref<256x1024xbf16, #tpu.memory_space<vmem>>, vector<256x1024xbf16>
    %c0_3 = arith.constant 0 : index
    %c0_4 = arith.constant 0 : index
    %2 = vector.load %arg3[%c0_3, %c0_4] : memref<256x1024xbf16, #tpu.memory_space<vmem>>, vector<256x1024xbf16>
    %c0_5 = arith.constant 0 : index
    %c0_6 = arith.constant 0 : index
    %3 = vector.load %arg4[%c0_5, %c0_6] : memref<1x1024xf32, #tpu.memory_space<vmem>>, vector<1x1024xf32>
    %cst = arith.constant 0.000000e+00 : f32
    %4 = vector.broadcast %cst : f32 to vector<2x256xf32>
    %c0_i32 = arith.constant 0 : i32
    %c80_i32 = arith.constant 80 : i32
    %5 = arith.addi %c0_i32, %c80_i32 : i32
    %c1_i32 = arith.constant 1 : i32
    %6:4 = scf.for %arg10 = %c0_i32 to %5 step %c1_i32 iter_args(%arg11 = %4, %arg12 = %4, %arg13 = %4, %arg14 = %4) -> (vector<2x256xf32>, vector<2x256xf32>, vector<2x256xf32>, vector<2x256xf32>)  : i32 {
      %16 = arith.index_cast %arg10 : i32 to index
      %c0_19 = arith.constant 0 : index
      %c0_20 = arith.constant 0 : index
      %17 = vector.load %arg0[%16, %c0_19, %c0_20] : memref<80x2x1024xf32, #tpu.memory_space<vmem>>, vector<1x2x1024xf32>
      %18 = vector.shape_cast %17 : vector<1x2x1024xf32> to vector<2x1024xf32>
      %19 = arith.truncf %arg11 : vector<2x256xf32> to vector<2x256xbf16>
      %cst_21 = arith.constant dense<0.000000e+00> : vector<2x1024xf32>
      %20 = tpu.matmul %19, %0, %cst_21 {dimension_numbers = #tpu.dot_dimension_numbers<[1], [0], [0], [1], [0, 0, 1, 1], [], []>} : vector<2x256xbf16>, vector<256x1024xbf16>, vector<2x1024xf32> -> vector<2x1024xf32>
      %21 = arith.addf %18, %20 : vector<2x1024xf32>
      %22 = vector.extract_strided_slice %21 {offsets = [0, 0], sizes = [2, 768], strides = [1, 1]} : vector<2x1024xf32> to vector<2x768xf32>
      %23 = arith.negf %22 : vector<2x768xf32>
      %24 = math.exp %23 : vector<2x768xf32>
      %cst_22 = arith.constant 1.000000e+00 : f32
      %25 = vector.broadcast %cst_22 : f32 to vector<2x768xf32>
      %26 = arith.addf %25, %24 : vector<2x768xf32>
      %27 = arith.divf %25, %26 : vector<2x768xf32>
      %28 = vector.extract_strided_slice %27 {offsets = [0, 0], sizes = [2, 256], strides = [1, 1]} : vector<2x768xf32> to vector<2x256xf32>
      %29 = vector.extract_strided_slice %27 {offsets = [0, 256], sizes = [2, 256], strides = [1, 1]} : vector<2x768xf32> to vector<2x256xf32>
      %30 = vector.extract_strided_slice %27 {offsets = [0, 512], sizes = [2, 256], strides = [1, 1]} : vector<2x768xf32> to vector<2x256xf32>
      %31 = vector.extract_strided_slice %21 {offsets = [0, 768], sizes = [2, 256], strides = [1, 1]} : vector<2x1024xf32> to vector<2x256xf32>
      %32 = math.tanh %31 : vector<2x256xf32>
      %33 = arith.mulf %29, %arg12 : vector<2x256xf32>
      %34 = arith.mulf %28, %32 : vector<2x256xf32>
      %35 = arith.addf %33, %34 : vector<2x256xf32>
      %36 = math.tanh %35 : vector<2x256xf32>
      %37 = arith.mulf %30, %36 : vector<2x256xf32>
      %38 = arith.truncf %37 : vector<2x256xf32> to vector<2x256xbf16>
      %cst_23 = arith.constant dense<0.000000e+00> : vector<2x1024xf32>
      %39 = tpu.matmul %38, %1, %cst_23 {dimension_numbers = #tpu.dot_dimension_numbers<[1], [0], [0], [1], [0, 0, 1, 1], [], []>} : vector<2x256xbf16>, vector<256x1024xbf16>, vector<2x1024xf32> -> vector<2x1024xf32>
      %40 = arith.truncf %arg13 : vector<2x256xf32> to vector<2x256xbf16>
      %cst_24 = arith.constant dense<0.000000e+00> : vector<2x1024xf32>
      %41 = tpu.matmul %40, %2, %cst_24 {dimension_numbers = #tpu.dot_dimension_numbers<[1], [0], [0], [1], [0, 0, 1, 1], [], []>} : vector<2x256xbf16>, vector<256x1024xbf16>, vector<2x1024xf32> -> vector<2x1024xf32>
      %42 = arith.addf %39, %41 : vector<2x1024xf32>
      %43 = vector.broadcast %3 : vector<1x1024xf32> to vector<2x1024xf32>
      %44 = arith.addf %42, %43 : vector<2x1024xf32>
      %45 = vector.extract_strided_slice %44 {offsets = [0, 0], sizes = [2, 768], strides = [1, 1]} : vector<2x1024xf32> to vector<2x768xf32>
      %46 = arith.negf %45 : vector<2x768xf32>
      %47 = math.exp %46 : vector<2x768xf32>
      %cst_25 = arith.constant 1.000000e+00 : f32
      %48 = vector.broadcast %cst_25 : f32 to vector<2x768xf32>
      %49 = arith.addf %48, %47 : vector<2x768xf32>
      %50 = arith.divf %48, %49 : vector<2x768xf32>
      %51 = vector.extract_strided_slice %50 {offsets = [0, 0], sizes = [2, 256], strides = [1, 1]} : vector<2x768xf32> to vector<2x256xf32>
      %52 = vector.extract_strided_slice %50 {offsets = [0, 256], sizes = [2, 256], strides = [1, 1]} : vector<2x768xf32> to vector<2x256xf32>
      %53 = vector.extract_strided_slice %50 {offsets = [0, 512], sizes = [2, 256], strides = [1, 1]} : vector<2x768xf32> to vector<2x256xf32>
      %54 = vector.extract_strided_slice %44 {offsets = [0, 768], sizes = [2, 256], strides = [1, 1]} : vector<2x1024xf32> to vector<2x256xf32>
      %55 = math.tanh %54 : vector<2x256xf32>
      %56 = arith.mulf %52, %arg14 : vector<2x256xf32>
      %57 = arith.mulf %51, %55 : vector<2x256xf32>
      %58 = arith.addf %56, %57 : vector<2x256xf32>
      %59 = math.tanh %58 : vector<2x256xf32>
      %60 = arith.mulf %53, %59 : vector<2x256xf32>
      scf.yield %37, %35, %60, %58 : vector<2x256xf32>, vector<2x256xf32>, vector<2x256xf32>, vector<2x256xf32>
    }
    %c80_i32_7 = arith.constant 80 : i32
    %c0_8 = arith.constant 0 : index
    %c0_9 = arith.constant 0 : index
    %7 = vector.load %arg8[%c0_8, %c0_9] : memref<2x256xf32, #tpu.memory_space<vmem>>, vector<2x256xf32>
    tpu.vector_store %arg8[%c0_8, %c0_9], %6#2 {strides = array<i32>} : memref<2x256xf32, #tpu.memory_space<vmem>>, vector<2x256xf32>,
    %c0_10 = arith.constant 0 : index
    %c0_11 = arith.constant 0 : index
    %8 = vector.load %arg9[%c0_10, %c0_11] : memref<2x256xf32, #tpu.memory_space<vmem>>, vector<2x256xf32>
    tpu.vector_store %arg9[%c0_10, %c0_11], %6#3 {strides = array<i32>} : memref<2x256xf32, #tpu.memory_space<vmem>>, vector<2x256xf32>,
    %9 = arith.truncf %6#2 : vector<2x256xf32> to vector<2x256xbf16>
    %c0_12 = arith.constant 0 : index
    %c0_13 = arith.constant 0 : index
    %10 = vector.load %arg5[%c0_12, %c0_13] : memref<256x128xbf16, #tpu.memory_space<vmem>>, vector<256x128xbf16>
    %cst_14 = arith.constant dense<0.000000e+00> : vector<2x128xf32>
    %11 = tpu.matmul %9, %10, %cst_14 {dimension_numbers = #tpu.dot_dimension_numbers<[1], [0], [0], [1], [0, 0, 1, 1], [], []>} : vector<2x256xbf16>, vector<256x128xbf16>, vector<2x128xf32> -> vector<2x128xf32>
    %c0_15 = arith.constant 0 : index
    %c0_16 = arith.constant 0 : index
    %12 = vector.load %arg6[%c0_15, %c0_16] : memref<1x128xf32, #tpu.memory_space<vmem>>, vector<1x128xf32>
    %13 = vector.broadcast %12 : vector<1x128xf32> to vector<2x128xf32>
    %14 = arith.addf %11, %13 : vector<2x128xf32>
    %c0_17 = arith.constant 0 : index
    %c0_18 = arith.constant 0 : index
    %15 = vector.load %arg7[%c0_17, %c0_18] : memref<2x128xf32, #tpu.memory_space<vmem>>, vector<2x128xf32>
    tpu.vector_store %arg7[%c0_17, %c0_18], %14 {strides = array<i32>} : memref<2x128xf32, #tpu.memory_space<vmem>>, vector<2x128xf32>,
    return
  }
}

</mosaic_0001>

<llo_original>
// kernel: tpu_custom_call.1
$region0: #{tpu_custom_call.1}
  #allocation0 [shape = 'u32[]', space=smem, size = 0x4, offset = 0x4, fixed_abs, tag = 'smem constant byte address 0x4 - core index']
  #allocation1 [shape = 'u32[144,128]{1,0:T(1,128)}', space=vmem, size = 0x12000, scoped, tag = 'internal scratch']
  %s0 = inlined_call_operand.hbm [shape: f32[80,2,1024], index: 0, kind: input, shape index: {}]
  %s1 = inlined_call_operand.hbm [shape: bf16[256,1024], index: 1, kind: input, shape index: {}]
  %s2 = inlined_call_operand.hbm [shape: bf16[256,1024], index: 2, kind: input, shape index: {}]
  %s3 = inlined_call_operand.hbm [shape: bf16[256,1024], index: 3, kind: input, shape index: {}]
  %s4 = inlined_call_operand.hbm [shape: f32[1,1024], index: 4, kind: input, shape index: {}]
  %s5 = inlined_call_operand.hbm [shape: bf16[256,128], index: 5, kind: input, shape index: {}]
  %s6 = inlined_call_operand.vmem [shape: f32[1,128], index: 6, kind: input, shape index: {}]
  %s7 = inlined_call_operand.hbm [shape: f32[2,128], index: 7, kind: output, shape index: {0}]
  %s8 = inlined_call_operand.hbm [shape: f32[2,256], index: 8, kind: output, shape index: {1}]
  %s9 = inlined_call_operand.hbm [shape: f32[2,256], index: 9, kind: output, shape index: {2}]
  %10 = xla_tuple %s7, %s8, %s9
  %s11 = sld [smem:[#allocation0]]
  $region85: #{tpu_custom_call.1} parent=0
    _
  %s13 = ssub.s32 1, %s11
  %s14 = scalar_select 0, %s13, %s11
  $region1: #{tpu_custom_call.1} parent=0
    #allocation2 [shape = 'u8[655360]{0}', space=vmem, size = 0xa0000, scoped, tag = 'input window, operand 0, single buffered']
    #allocation3 [shape = 's32[1]{0}', space=sflag, size = 0x4, scoped, tag = 'scoped memory for tpu_custom_call.1']
    #allocation4 [shape = 's32[1]{0}', space=sflag, size = 0x4, scoped, tag = 'scoped memory for tpu_custom_call.1']
    #allocation5 [shape = 'u8[524288]{0}', space=vmem, size = 0x80000, scoped, tag = 'input window, operand 1, single buffered']
    #allocation6 [shape = 's32[1]{0}', space=sflag, size = 0x4, scoped, tag = 'scoped memory for tpu_custom_call.1']
    #allocation7 [shape = 'u8[524288]{0}', space=vmem, size = 0x80000, scoped, tag = 'input window, operand 2, single buffered']
    #allocation8 [shape = 'u8[524288]{0}', space=vmem, size = 0x80000, scoped, tag = 'input window, operand 3, single buffered']
    #allocation9 [shape = 's32[1]{0}', space=sflag, size = 0x4, scoped, tag = 'scoped memory for tpu_custom_call.1']
    #allocation10 [shape = 'u8[4096]{0}', space=vmem, size = 0x1000, scoped, tag = 'input window, operand 4, single buffered']
    #allocation11 [shape = 'u8[65536]{0}', space=vmem, size = 0x10000, scoped, tag = 'input window, operand 5, single buffered']
    #allocation12 [shape = 's32[1]{0}', space=sflag, size = 0x4, scoped, tag = 'scoped memory for tpu_custom_call.1']
    #allocation13 [shape = 'u8[1024]{0}', space=vmem, size = 0x400, scoped, tag = 'output window, operand 0, single buffered']
    #allocation14 [shape = 'u8[2048]{0}', space=vmem, size = 0x800, scoped, tag = 'output window, operand 1, single buffered']
    #allocation15 [shape = 's32[1]{0}', space=sflag, size = 0x4, scoped, tag = 'scoped memory for tpu_custom_call.1']
    #allocation16 [shape = 'u8[2048]{0}', space=vmem, size = 0x800, scoped, tag = 'output window, operand 2, single buffered']
    %15 = vsyncpa [#allocation3], 0
    %16 = vsyncpa [#allocation6], 0
    %17 = vsyncpa [#allocation9], 0
    %18 = vsyncpa [#allocation12], 0
    %19 = vsyncpa [#allocation4], 0
    %20 = vsyncpa [#allocation15], 0
    // Predicated region
    $region2: #{tpu_custom_call.1} parent=1 // pred_check
      _
    $region3: #{tpu_custom_call.1} parent=1 // pred_check_branch
      %22 = sbr.rel (0) target = $region5
    $region4: #{tpu_custom_call.1} parent=1 // pred_region
      %s24 = ssub.s32 20480, 20480
      %25 = vsyncadd [#allocation3], %s24
      %s26 = sshll.u32 [#allocation2], 4
      %s27 = int_to_ptr.vmem [resolvable:$true] %s26
      %32 = dma.hbm_to_vmem [thread:$0]  %s0, 20480, %s27, [#allocation3], 256, 256, 16
    $region5: #{tpu_custom_call.1} parent=1 // pred_fallthru
      _
    // Predicated region
    $region6: #{tpu_custom_call.1} parent=1 // pred_check
      _
    $region7: #{tpu_custom_call.1} parent=1 // pred_check_branch
      %34 = sbr.rel (0) target = $region9
    $region8: #{tpu_custom_call.1} parent=1 // pred_region
      %s36 = ssub.s32 16384, 16384
      %37 = vsyncadd [#allocation6], %s36
      %s38 = sshll.u32 [#allocation5], 4
      %s39 = int_to_ptr.vmem [resolvable:$true] %s38
      %44 = dma.hbm_to_vmem [thread:$0]  %s1, 16384, %s39, [#allocation6], 512, 512, 32
    $region9: #{tpu_custom_call.1} parent=1 // pred_fallthru
      _
    // Predicated region
    $region10: #{tpu_custom_call.1} parent=1 // pred_check
      _
    $region11: #{tpu_custom_call.1} parent=1 // pred_check_branch
      %46 = sbr.rel (0) target = $region13
    $region12: #{tpu_custom_call.1} parent=1 // pred_region
      %s48 = ssub.s32 16384, 16384
      %49 = vsyncadd [#allocation6], %s48
      %s50 = sshll.u32 [#allocation7], 4
      %s51 = int_to_ptr.vmem [resolvable:$true] %s50
      %56 = dma.hbm_to_vmem [thread:$0]  %s2, 16384, %s51, [#allocation6], 512, 512, 32
    $region13: #{tpu_custom_call.1} parent=1 // pred_fallthru
      _
    // Predicated region
    $region14: #{tpu_custom_call.1} parent=1 // pred_check
      _
    $region15: #{tpu_custom_call.1} parent=1 // pred_check_branch
      %58 = sbr.rel (0) target = $region17
    $region16: #{tpu_custom_call.1} parent=1 // pred_region
      %s60 = ssub.s32 16384, 16384
      %61 = vsyncadd [#allocation9], %s60
      %s62 = sshll.u32 [#allocation8], 4
      %s63 = int_to_ptr.vmem [resolvable:$true] %s62
      %68 = dma.hbm_to_vmem [thread:$0]  %s3, 16384, %s63, [#allocation9], 512, 512, 32
    $region17: #{tpu_custom_call.1} parent=1 // pred_fallthru
      _
    // Predicated region
    $region18: #{tpu_custom_call.1} parent=1 // pred_check
      _
    $region19: #{tpu_custom_call.1} parent=1 // pred_check_branch
      %70 = sbr.rel (0) target = $region21
    $region20: #{tpu_custom_call.1} parent=1 // pred_region
      %s72 = ssub.s32 128, 128
      %73 = vsyncadd [#allocation9], %s72
      %s75 = sshll.u32 [#allocation10], 4
      %s76 = int_to_ptr.vmem [resolvable:$true] %s75
      %78 = dma.hbm_to_vmem [thread:$0]  %s4, 128, %s76, [#allocation9]
    $region21: #{tpu_custom_call.1} parent=1 // pred_fallthru
      _
    // Predicated region
    $region22: #{tpu_custom_call.1} parent=1 // pred_check
      _
    $region23: #{tpu_custom_call.1} parent=1 // pred_check_branch
      %80 = sbr.rel (0) target = $region25
    $region24: #{tpu_custom_call.1} parent=1 // pred_region
      %s82 = ssub.s32 2048, 2048
      %83 = vsyncadd [#allocation12], %s82
      %s84 = sshll.u32 [#allocation11], 4
      %s85 = int_to_ptr.vmem [resolvable:$true] %s84
      %90 = dma.hbm_to_vmem [thread:$0]  %s5, 2048, %s85, [#allocation12], 64, 64, 4
    $region25: #{tpu_custom_call.1} parent=1 // pred_fallthru
      _
    // Predicated region
    $region26: #{tpu_custom_call.1} parent=1 // pred_check
      _
    $region27: #{tpu_custom_call.1} parent=1 // pred_check_branch
      %92 = sbr.rel (0) target = $region29
    $region28: #{tpu_custom_call.1} parent=1 // pred_region
      _
    $region29: #{tpu_custom_call.1} parent=1 // pred_fallthru
      _
    // Predicated region
    $region30: #{tpu_custom_call.1} parent=1 // pred_check
      _
    $region31: #{tpu_custom_call.1} parent=1 // pred_check_branch
      %94 = sbr.rel (0) target = $region33
    $region32: #{tpu_custom_call.1} parent=1 // pred_region
      %95 = dma.done [#allocation3], 20480
    $region33: #{tpu_custom_call.1} parent=1 // pred_fallthru
      _
    // Predicated region
    $region34: #{tpu_custom_call.1} parent=1 // pred_check
      _
    $region35: #{tpu_custom_call.1} parent=1 // pred_check_branch
      %97 = sbr.rel (0) target = $region37
    $region36: #{tpu_custom_call.1} parent=1 // pred_region
      %98 = dma.done [#allocation6], 16384
    $region37: #{tpu_custom_call.1} parent=1 // pred_fallthru
      _
    // Predicated region
    $region38: #{tpu_custom_call.1} parent=1 // pred_check
      _
    $region39: #{tpu_custom_call.1} parent=1 // pred_check_branch
      %100 = sbr.rel (0) target = $region41
    $region40: #{tpu_custom_call.1} parent=1 // pred_region
      %101 = dma.done [#allocation6], 16384
    $region41: #{tpu_custom_call.1} parent=1 // pred_fallthru
      _
    // Predicated region
    $region42: #{tpu_custom_call.1} parent=1 // pred_check
      _
    $region43: #{tpu_custom_call.1} parent=1 // pred_check_branch
      %103 = sbr.rel (0) target = $region45
    $region44: #{tpu_custom_call.1} parent=1 // pred_region
      %104 = dma.done [#allocation9], 16384
    $region45: #{tpu_custom_call.1} parent=1 // pred_fallthru
      _
    // Predicated region
    $region46: #{tpu_custom_call.1} parent=1 // pred_check
      _
    $region47: #{tpu_custom_call.1} parent=1 // pred_check_branch
      %106 = sbr.rel (0) target = $region49
    $region48: #{tpu_custom_call.1} parent=1 // pred_region
      %107 = dma.done [#allocation9], 128
    $region49: #{tpu_custom_call.1} parent=1 // pred_fallthru
      _
    // Predicated region
    $region50: #{tpu_custom_call.1} parent=1 // pred_check
      _
    $region51: #{tpu_custom_call.1} parent=1 // pred_check_branch
      %109 = sbr.rel (0) target = $region53
    $region52: #{tpu_custom_call.1} parent=1 // pred_region
      %110 = dma.done [#allocation12], 2048
    $region53: #{tpu_custom_call.1} parent=1 // pred_fallthru
      _
    %v112 = vld [vmem:[#allocation5] sm:$0xff]
    %v113 = vld [vmem:[#allocation5 + $0x8] sm:$0xff]
    %v114 = vld [vmem:[#allocation5 + $0x10] sm:$0xff]
    %v115 = vld [vmem:[#allocation5 + $0x18] sm:$0xff]
    %v116 = vld [vmem:[#allocation5 + $0x20] sm:$0xff]
    %v117 = vld [vmem:[#allocation5 + $0x28] sm:$0xff]
    %v118 = vld [vmem:[#allocation5 + $0x30] sm:$0xff]
    %v119 = vld [vmem:[#allocation5 + $0x38] sm:$0xff]
    %v120 = vld [vmem:[#allocation5 + $0x40] sm:$0xff]
    %v121 = vld [vmem:[#allocation5 + $0x48] sm:$0xff]
    %v122 = vld [vmem:[#allocation5 + $0x50] sm:$0xff]
    %v123 = vld [vmem:[#allocation5 + $0x58] sm:$0xff]
    %v124 = vld [vmem:[#allocation5 + $0x60] sm:$0xff]
    %v125 = vld [vmem:[#allocation5 + $0x68] sm:$0xff]
    %v126 = vld [vmem:[#allocation5 + $0x70] sm:$0xff]
    %v127 = vld [vmem:[#allocation5 + $0x78] sm:$0xff]
    %v128 = vld [vmem:[#allocation5 + $0x80] sm:$0xff]
    %v129 = vld [vmem:[#allocation5 + $0x88] sm:$0xff]
    %v130 = vld [vmem:[#allocation5 + $0x90] sm:$0xff]
    %v131 = vld [vmem:[#allocation5 + $0x98] sm:$0xff]
    %v132 = vld [vmem:[#allocation5 + $0xa0] sm:$0xff]
    %v133 = vld [vmem:[#allocation5 + $0xa8] sm:$0xff]
    %v134 = vld [vmem:[#allocation5 + $0xb0] sm:$0xff]
    %v135 = vld [vmem:[#allocation5 + $0xb8] sm:$0xff]
    %v136 = vld [vmem:[#allocation5 + $0xc0] sm:$0xff]
    %v137 = vld [vmem:[#allocation5 + $0xc8] sm:$0xff]
    %v138 = vld [vmem:[#allocation5 + $0xd0] sm:$0xff]
    %v139 = vld [vmem:[#allocation5 + $0xd8] sm:$0xff]
    %v140 = vld [vmem:[#allocation5 + $0xe0] sm:$0xff]
    %v141 = vld [vmem:[#allocation5 + $0xe8] sm:$0xff]
    %v142 = vld [vmem:[#allocation5 + $0xf0] sm:$0xff]
    %v143 = vld [vmem:[#allocation5 + $0xf8] sm:$0xff]
    %v144 = vld [vmem:[#allocation5 + $0x100] sm:$0xff]
    %v145 = vld [vmem:[#allocation5 + $0x108] sm:$0xff]
    %v146 = vld [vmem:[#allocation5 + $0x110] sm:$0xff]
    %v147 = vld [vmem:[#allocation5 + $0x118] sm:$0xff]
    %v148 = vld [vmem:[#allocation5 + $0x120] sm:$0xff]
    %v149 = vld [vmem:[#allocation5 + $0x128] sm:$0xff]
    %v150 = vld [vmem:[#allocation5 + $0x130] sm:$0xff]
    %v151 = vld [vmem:[#allocation5 + $0x138] sm:$0xff]
    %v152 = vld [vmem:[#allocation5 + $0x140] sm:$0xff]
    %v153 = vld [vmem:[#allocation5 + $0x148] sm:$0xff]
    %v154 = vld [vmem:[#allocation5 + $0x150] sm:$0xff]
    %v155 = vld [vmem:[#allocation5 + $0x158] sm:$0xff]
    %v156 = vld [vmem:[#allocation5 + $0x160] sm:$0xff]
    %v157 = vld [vmem:[#allocation5 + $0x168] sm:$0xff]
    %v158 = vld [vmem:[#allocation5 + $0x170] sm:$0xff]
    %v159 = vld [vmem:[#allocation5 + $0x178] sm:$0xff]
    %v160 = vld [vmem:[#allocation5 + $0x180] sm:$0xff]
    %v161 = vld [vmem:[#allocation5 + $0x188] sm:$0xff]
    %v162 = vld [vmem:[#allocation5 + $0x190] sm:$0xff]
    %v163 = vld [vmem:[#allocation5 + $0x198] sm:$0xff]
    %v164 = vld [vmem:[#allocation5 + $0x1a0] sm:$0xff]
    %v165 = vld [vmem:[#allocation5 + $0x1a8] sm:$0xff]
    %v166 = vld [vmem:[#allocation5 + $0x1b0] sm:$0xff]
    %v167 = vld [vmem:[#allocation5 + $0x1b8] sm:$0xff]
    %v168 = vld [vmem:[#allocation5 + $0x1c0] sm:$0xff]
    %v169 = vld [vmem:[#allocation5 + $0x1c8] sm:$0xff]
    %v170 = vld [vmem:[#allocation5 + $0x1d0] sm:$0xff]
    %v171 = vld [vmem:[#allocation5 + $0x1d8] sm:$0xff]
    %v172 = vld [vmem:[#allocation5 + $0x1e0] sm:$0xff]
    %v173 = vld [vmem:[#allocation5 + $0x1e8] sm:$0xff]
    %v174 = vld [vmem:[#allocation5 + $0x1f0] sm:$0xff]
    %v175 = vld [vmem:[#allocation5 + $0x1f8] sm:$0xff]
    %v176 = vld [vmem:[#allocation5 + $0x200] sm:$0xff]
    %v177 = vld [vmem:[#allocation5 + $0x208] sm:$0xff]
    %v178 = vld [vmem:[#allocation5 + $0x210] sm:$0xff]
    %v179 = vld [vmem:[#allocation5 + $0x218] sm:$0xff]
    %v180 = vld [vmem:[#allocation5 + $0x220] sm:$0xff]
    %v181 = vld [vmem:[#allocation5 + $0x228] sm:$0xff]
    %v182 = vld [vmem:[#allocation5 + $0x230] sm:$0xff]
    %v183 = vld [vmem:[#allocation5 + $0x238] sm:$0xff]
    %v184 = vld [vmem:[#allocation5 + $0x240] sm:$0xff]
    %v185 = vld [vmem:[#allocation5 + $0x248] sm:$0xff]
    %v186 = vld [vmem:[#allocation5 + $0x250] sm:$0xff]
    %v187 = vld [vmem:[#allocation5 + $0x258] sm:$0xff]
    %v188 = vld [vmem:[#allocation5 + $0x260] sm:$0xff]
    %v189 = vld [vmem:[#allocation5 + $0x268] sm:$0xff]
    %v190 = vld [vmem:[#allocation5 + $0x270] sm:$0xff]
    %v191 = vld [vmem:[#allocation5 + $0x278] sm:$0xff]
    %v192 = vld [vmem:[#allocation5 + $0x280] sm:$0xff]
    %v193 = vld [vmem:[#allocation5 + $0x288] sm:$0xff]
    %v194 = vld [vmem:[#allocation5 + $0x290] sm:$0xff]
    %v195 = vld [vmem:[#allocation5 + $0x298] sm:$0xff]
    %v196 = vld [vmem:[#allocation5 + $0x2a0] sm:$0xff]
    %v197 = vld [vmem:[#allocation5 + $0x2a8] sm:$0xff]
    %v198 = vld [vmem:[#allocation5 + $0x2b0] sm:$0xff]
    %v199 = vld [vmem:[#allocation5 + $0x2b8] sm:$0xff]
    %v200 = vld [vmem:[#allocation5 + $0x2c0] sm:$0xff]
    %v201 = vld [vmem:[#allocation5 + $0x2c8] sm:$0xff]
    %v202 = vld [vmem:[#allocation5 + $0x2d0] sm:$0xff]
    %v203 = vld [vmem:[#allocation5 + $0x2d8] sm:$0xff]
    %v204 = vld [vmem:[#allocation5 + $0x2e0] sm:$0xff]
    %v205 = vld [vmem:[#allocation5 + $0x2e8] sm:$0xff]
    %v206 = vld [vmem:[#allocation5 + $0x2f0] sm:$0xff]
    %v207 = vld [vmem:[#allocation5 + $0x2f8] sm:$0xff]
    %v208 = vld [vmem:[#allocation5 + $0x300] sm:$0xff]
    %v209 = vld [vmem:[#allocation5 + $0x308] sm:$0xff]
    %v210 = vld [vmem:[#allocation5 + $0x310] sm:$0xff]
    %v211 = vld [vmem:[#allocation5 + $0x318] sm:$0xff]
    %v212 = vld [vmem:[#allocation5 + $0x320] sm:$0xff]
    %v213 = vld [vmem:[#allocation5 + $0x328] sm:$0xff]
    %v214 = vld [vmem:[#allocation5 + $0x330] sm:$0xff]
    %v215 = vld [vmem:[#allocation5 + $0x338] sm:$0xff]
    %v216 = vld [vmem:[#allocation5 + $0x340] sm:$0xff]
    %v217 = vld [vmem:[#allocation5 + $0x348] sm:$0xff]
    %v218 = vld [vmem:[#allocation5 + $0x350] sm:$0xff]
    %v219 = vld [vmem:[#allocation5 + $0x358] sm:$0xff]
    %v220 = vld [vmem:[#allocation5 + $0x360] sm:$0xff]
    %v221 = vld [vmem:[#allocation5 + $0x368] sm:$0xff]
    %v222 = vld [vmem:[#allocation5 + $0x370] sm:$0xff]
    %v223 = vld [vmem:[#allocation5 + $0x378] sm:$0xff]
    %v224 = vld [vmem:[#allocation5 + $0x380] sm:$0xff]
    %v225 = vld [vmem:[#allocation5 + $0x388] sm:$0xff]
    %v226 = vld [vmem:[#allocation5 + $0x390] sm:$0xff]
    %v227 = vld [vmem:[#allocation5 + $0x398] sm:$0xff]
    %v228 = vld [vmem:[#allocation5 + $0x3a0] sm:$0xff]
    %v229 = vld [vmem:[#allocation5 + $0x3a8] sm:$0xff]
    %v230 = vld [vmem:[#allocation5 + $0x3b0] sm:$0xff]
    %v231 = vld [vmem:[#allocation5 + $0x3b8] sm:$0xff]
    %v232 = vld [vmem:[#allocation5 + $0x3c0] sm:$0xff]
    %v233 = vld [vmem:[#allocation5 + $0x3c8] sm:$0xff]
    %v234 = vld [vmem:[#allocation5 + $0x3d0] sm:$0xff]
    %v235 = vld [vmem:[#allocation5 + $0x3d8] sm:$0xff]
    %v236 = vld [vmem:[#allocation5 + $0x3e0] sm:$0xff]
    %v237 = vld [vmem:[#allocation5 + $0x3e8] sm:$0xff]
    %v238 = vld [vmem:[#allocation5 + $0x3f0] sm:$0xff]
    %v239 = vld [vmem:[#allocation5 + $0x3f8] sm:$0xff]
    %v240 = vld [vmem:[#allocation7] sm:$0xff]
    %v241 = vld [vmem:[#allocation7 + $0x8] sm:$0xff]
    %v242 = vld [vmem:[#allocation7 + $0x10] sm:$0xff]
    %v243 = vld [vmem:[#allocation7 + $0x18] sm:$0xff]
    %v244 = vld [vmem:[#allocation7 + $0x20] sm:$0xff]
    %v245 = vld [vmem:[#allocation7 + $0x28] sm:$0xff]
    %v246 = vld [vmem:[#allocation7 + $0x30] sm:$0xff]
    %v247 = vld [vmem:[#allocation7 + $0x38] sm:$0xff]
    %v248 = vld [vmem:[#allocation7 + $0x40] sm:$0xff]
    %v249 = vld [vmem:[#allocation7 + $0x48] sm:$0xff]
    %v250 = vld [vmem:[#allocation7 + $0x50] sm:$0xff]
    %v251 = vld [vmem:[#allocation7 + $0x58] sm:$0xff]
    %v252 = vld [vmem:[#allocation7 + $0x60] sm:$0xff]
    %v253 = vld [vmem:[#allocation7 + $0x68] sm:$0xff]
    %v254 = vld [vmem:[#allocation7 + $0x70] sm:$0xff]
    %v255 = vld [vmem:[#allocation7 + $0x78] sm:$0xff]
    %v256 = vld [vmem:[#allocation7 + $0x80] sm:$0xff]
    %v257 = vld [vmem:[#allocation7 + $0x88] sm:$0xff]
    %v258 = vld [vmem:[#allocation7 + $0x90] sm:$0xff]
    %v259 = vld [vmem:[#allocation7 + $0x98] sm:$0xff]
    %v260 = vld [vmem:[#allocation7 + $0xa0] sm:$0xff]
    %v261 = vld [vmem:[#allocation7 + $0xa8] sm:$0xff]
    %v262 = vld [vmem:[#allocation7 + $0xb0] sm:$0xff]
    %v263 = vld [vmem:[#allocation7 + $0xb8] sm:$0xff]
    %v264 = vld [vmem:[#allocation7 + $0xc0] sm:$0xff]
    %v265 = vld [vmem:[#allocation7 + $0xc8] sm:$0xff]
    %v266 = vld [vmem:[#allocation7 + $0xd0] sm:$0xff]
    %v267 = vld [vmem:[#allocation7 + $0xd8] sm:$0xff]
    %v268 = vld [vmem:[#allocation7 + $0xe0] sm:$0xff]
    %v269 = vld [vmem:[#allocation7 + $0xe8] sm:$0xff]
    %v270 = vld [vmem:[#allocation7 + $0xf0] sm:$0xff]
    %v271 = vld [vmem:[#allocation7 + $0xf8] sm:$0xff]
    %v272 = vld [vmem:[#allocation7 + $0x100] sm:$0xff]
    %v273 = vld [vmem:[#allocation7 + $0x108] sm:$0xff]
    %v274 = vld [vmem:[#allocation7 + $0x110] sm:$0xff]
    %v275 = vld [vmem:[#allocation7 + $0x118] sm:$0xff]
    %v276 = vld [vmem:[#allocation7 + $0x120] sm:$0xff]
    %v277 = vld [vmem:[#allocation7 + $0x128] sm:$0xff]
    %v278 = vld [vmem:[#allocation7 + $0x130] sm:$0xff]
    %v279 = vld [vmem:[#allocation7 + $0x138] sm:$0xff]
    %v280 = vld [vmem:[#allocation7 + $0x140] sm:$0xff]
    %v281 = vld [vmem:[#allocation7 + $0x148] sm:$0xff]
    %v282 = vld [vmem:[#allocation7 + $0x150] sm:$0xff]
    %v283 = vld [vmem:[#allocation7 + $0x158] sm:$0xff]
    %v284 = vld [vmem:[#allocation7 + $0x160] sm:$0xff]
    %v285 = vld [vmem:[#allocation7 + $0x168] sm:$0xff]
    %v286 = vld [vmem:[#allocation7 + $0x170] sm:$0xff]
    %v287 = vld [vmem:[#allocation7 + $0x178] sm:$0xff]
    %v288 = vld [vmem:[#allocation7 + $0x180] sm:$0xff]
    %v289 = vld [vmem:[#allocation7 + $0x188] sm:$0xff]
    %v290 = vld [vmem:[#allocation7 + $0x190] sm:$0xff]
    %v291 = vld [vmem:[#allocation7 + $0x198] sm:$0xff]
    %v292 = vld [vmem:[#allocation7 + $0x1a0] sm:$0xff]
    %v293 = vld [vmem:[#allocation7 + $0x1a8] sm:$0xff]
    %v294 = vld [vmem:[#allocation7 + $0x1b0] sm:$0xff]
    %v295 = vld [vmem:[#allocation7 + $0x1b8] sm:$0xff]
    %v296 = vld [vmem:[#allocation7 + $0x1c0] sm:$0xff]
    %v297 = vld [vmem:[#allocation7 + $0x1c8] sm:$0xff]
    %v298 = vld [vmem:[#allocation7 + $0x1d0] sm:$0xff]
    %v299 = vld [vmem:[#allocation7 + $0x1d8] sm:$0xff]
    %v300 = vld [vmem:[#allocation7 + $0x1e0] sm:$0xff]
    %v301 = vld [vmem:[#allocation7 + $0x1e8] sm:$0xff]
    %v302 = vld [vmem:[#allocation7 + $0x1f0] sm:$0xff]
    %v303 = vld [vmem:[#allocation7 + $0x1f8] sm:$0xff]
    %v304 = vld [vmem:[#allocation7 + $0x200] sm:$0xff]
    %v305 = vld [vmem:[#allocation7 + $0x208] sm:$0xff]
    %v306 = vld [vmem:[#allocation7 + $0x210] sm:$0xff]
    %v307 = vld [vmem:[#allocation7 + $0x218] sm:$0xff]
    %v308 = vld [vmem:[#allocation7 + $0x220] sm:$0xff]
    %v309 = vld [vmem:[#allocation7 + $0x228] sm:$0xff]
    %v310 = vld [vmem:[#allocation7 + $0x230] sm:$0xff]
    %v311 = vld [vmem:[#allocation7 + $0x238] sm:$0xff]
    %v312 = vld [vmem:[#allocation7 + $0x240] sm:$0xff]
    %v313 = vld [vmem:[#allocation7 + $0x248] sm:$0xff]
    %v314 = vld [vmem:[#allocation7 + $0x250] sm:$0xff]
    %v315 = vld [vmem:[#allocation7 + $0x258] sm:$0xff]
    %v316 = vld [vmem:[#allocation7 + $0x260] sm:$0xff]
    %v317 = vld [vmem:[#allocation7 + $0x268] sm:$0xff]
    %v318 = vld [vmem:[#allocation7 + $0x270] sm:$0xff]
    %v319 = vld [vmem:[#allocation7 + $0x278] sm:$0xff]
    %v320 = vld [vmem:[#allocation7 + $0x280] sm:$0xff]
    %v321 = vld [vmem:[#allocation7 + $0x288] sm:$0xff]
    %v322 = vld [vmem:[#allocation7 + $0x290] sm:$0xff]
    %v323 = vld [vmem:[#allocation7 + $0x298] sm:$0xff]
    %v324 = vld [vmem:[#allocation7 + $0x2a0] sm:$0xff]
    %v325 = vld [vmem:[#allocation7 + $0x2a8] sm:$0xff]
    %v326 = vld [vmem:[#allocation7 + $0x2b0] sm:$0xff]
    %v327 = vld [vmem:[#allocation7 + $0x2b8] sm:$0xff]
    %v328 = vld [vmem:[#allocation7 + $0x2c0] sm:$0xff]
    %v329 = vld [vmem:[#allocation7 + $0x2c8] sm:$0xff]
    %v330 = vld [vmem:[#allocation7 + $0x2d0] sm:$0xff]
    %v331 = vld [vmem:[#allocation7 + $0x2d8] sm:$0xff]
    %v332 = vld [vmem:[#allocation7 + $0x2e0] sm:$0xff]
    %v333 = vld [vmem:[#allocation7 + $0x2e8] sm:$0xff]
    %v334 = vld [vmem:[#allocation7 + $0x2f0] sm:$0xff]
    %v335 = vld [vmem:[#allocation7 + $0x2f8] sm:$0xff]
    %v336 = vld [vmem:[#allocation7 + $0x300] sm:$0xff]
    %v337 = vld [vmem:[#allocation7 + $0x308] sm:$0xff]
    %v338 = vld [vmem:[#allocation7 + $0x310] sm:$0xff]
    %v339 = vld [vmem:[#allocation7 + $0x318] sm:$0xff]
    %v340 = vld [vmem:[#allocation7 + $0x320] sm:$0xff]
    %v341 = vld [vmem:[#allocation7 + $0x328] sm:$0xff]
    %v342 = vld [vmem:[#allocation7 + $0x330] sm:$0xff]
    %v343 = vld [vmem:[#allocation7 + $0x338] sm:$0xff]
    %v344 = vld [vmem:[#allocation7 + $0x340] sm:$0xff]
    %v345 = vld [vmem:[#allocation7 + $0x348] sm:$0xff]
    %v346 = vld [vmem:[#allocation7 + $0x350] sm:$0xff]
    %v347 = vld [vmem:[#allocation7 + $0x358] sm:$0xff]
    %v348 = vld [vmem:[#allocation7 + $0x360] sm:$0xff]
    %v349 = vld [vmem:[#allocation7 + $0x368] sm:$0xff]
    %v350 = vld [vmem:[#allocation7 + $0x370] sm:$0xff]
    %v351 = vld [vmem:[#allocation7 + $0x378] sm:$0xff]
    %v352 = vld [vmem:[#allocation7 + $0x380] sm:$0xff]
    %v353 = vld [vmem:[#allocation7 + $0x388] sm:$0xff]
    %v354 = vld [vmem:[#allocation7 + $0x390] sm:$0xff]
    %v355 = vld [vmem:[#allocation7 + $0x398] sm:$0xff]
    %v356 = vld [vmem:[#allocation7 + $0x3a0] sm:$0xff]
    %v357 = vld [vmem:[#allocation7 + $0x3a8] sm:$0xff]
    %v358 = vld [vmem:[#allocation7 + $0x3b0] sm:$0xff]
    %v359 = vld [vmem:[#allocation7 + $0x3b8] sm:$0xff]
    %v360 = vld [vmem:[#allocation7 + $0x3c0] sm:$0xff]
    %v361 = vld [vmem:[#allocation7 + $0x3c8] sm:$0xff]
    %v362 = vld [vmem:[#allocation7 + $0x3d0] sm:$0xff]
    %v363 = vld [vmem:[#allocation7 + $0x3d8] sm:$0xff]
    %v364 = vld [vmem:[#allocation7 + $0x3e0] sm:$0xff]
    %v365 = vld [vmem:[#allocation7 + $0x3e8] sm:$0xff]
    %v366 = vld [vmem:[#allocation7 + $0x3f0] sm:$0xff]
    %v367 = vld [vmem:[#allocation7 + $0x3f8] sm:$0xff]
    %v368 = vld [vmem:[#allocation8] sm:$0xff]
    %v369 = vld [vmem:[#allocation8 + $0x8] sm:$0xff]
    %v370 = vld [vmem:[#allocation8 + $0x10] sm:$0xff]
    %v371 = vld [vmem:[#allocation8 + $0x18] sm:$0xff]
    %v372 = vld [vmem:[#allocation8 + $0x20] sm:$0xff]
    %v373 = vld [vmem:[#allocation8 + $0x28] sm:$0xff]
    %v374 = vld [vmem:[#allocation8 + $0x30] sm:$0xff]
    %v375 = vld [vmem:[#allocation8 + $0x38] sm:$0xff]
    %v376 = vld [vmem:[#allocation8 + $0x40] sm:$0xff]
    %v377 = vld [vmem:[#allocation8 + $0x48] sm:$0xff]
    %v378 = vld [vmem:[#allocation8 + $0x50] sm:$0xff]
    %v379 = vld [vmem:[#allocation8 + $0x58] sm:$0xff]
    %v380 = vld [vmem:[#allocation8 + $0x60] sm:$0xff]
    %v381 = vld [vmem:[#allocation8 + $0x68] sm:$0xff]
    %v382 = vld [vmem:[#allocation8 + $0x70] sm:$0xff]
    %v383 = vld [vmem:[#allocation8 + $0x78] sm:$0xff]
    %v384 = vld [vmem:[#allocation8 + $0x80] sm:$0xff]
    %v385 = vld [vmem:[#allocation8 + $0x88] sm:$0xff]
    %v386 = vld [vmem:[#allocation8 + $0x90] sm:$0xff]
    %v387 = vld [vmem:[#allocation8 + $0x98] sm:$0xff]
    %v388 = vld [vmem:[#allocation8 + $0xa0] sm:$0xff]
    %v389 = vld [vmem:[#allocation8 + $0xa8] sm:$0xff]
    %v390 = vld [vmem:[#allocation8 + $0xb0] sm:$0xff]
    %v391 = vld [vmem:[#allocation8 + $0xb8] sm:$0xff]
    %v392 = vld [vmem:[#allocation8 + $0xc0] sm:$0xff]
    %v393 = vld [vmem:[#allocation8 + $0xc8] sm:$0xff]
    %v394 = vld [vmem:[#allocation8 + $0xd0] sm:$0xff]
    %v395 = vld [vmem:[#allocation8 + $0xd8] sm:$0xff]
    %v396 = vld [vmem:[#allocation8 + $0xe0] sm:$0xff]
    %v397 = vld [vmem:[#allocation8 + $0xe8] sm:$0xff]
    %v398 = vld [vmem:[#allocation8 + $0xf0] sm:$0xff]
    %v399 = vld [vmem:[#allocation8 + $0xf8] sm:$0xff]
    %v400 = vld [vmem:[#allocation8 + $0x100] sm:$0xff]
    %v401 = vld [vmem:[#allocation8 + $0x108] sm:$0xff]
    %v402 = vld [vmem:[#allocation8 + $0x110] sm:$0xff]
    %v403 = vld [vmem:[#allocation8 + $0x118] sm:$0xff]
    %v404 = vld [vmem:[#allocation8 + $0x120] sm:$0xff]
    %v405 = vld [vmem:[#allocation8 + $0x128] sm:$0xff]
    %v406 = vld [vmem:[#allocation8 + $0x130] sm:$0xff]
    %v407 = vld [vmem:[#allocation8 + $0x138] sm:$0xff]
    %v408 = vld [vmem:[#allocation8 + $0x140] sm:$0xff]
    %v409 = vld [vmem:[#allocation8 + $0x148] sm:$0xff]
    %v410 = vld [vmem:[#allocation8 + $0x150] sm:$0xff]
    %v411 = vld [vmem:[#allocation8 + $0x158] sm:$0xff]
    %v412 = vld [vmem:[#allocation8 + $0x160] sm:$0xff]
    %v413 = vld [vmem:[#allocation8 + $0x168] sm:$0xff]
    %v414 = vld [vmem:[#allocation8 + $0x170] sm:$0xff]
    %v415 = vld [vmem:[#allocation8 + $0x178] sm:$0xff]
    %v416 = vld [vmem:[#allocation8 + $0x180] sm:$0xff]
    %v417 = vld [vmem:[#allocation8 + $0x188] sm:$0xff]
    %v418 = vld [vmem:[#allocation8 + $0x190] sm:$0xff]
    %v419 = vld [vmem:[#allocation8 + $0x198] sm:$0xff]
    %v420 = vld [vmem:[#allocation8 + $0x1a0] sm:$0xff]
    %v421 = vld [vmem:[#allocation8 + $0x1a8] sm:$0xff]
    %v422 = vld [vmem:[#allocation8 + $0x1b0] sm:$0xff]
    %v423 = vld [vmem:[#allocation8 + $0x1b8] sm:$0xff]
    %v424 = vld [vmem:[#allocation8 + $0x1c0] sm:$0xff]
    %v425 = vld [vmem:[#allocation8 + $0x1c8] sm:$0xff]
    %v426 = vld [vmem:[#allocation8 + $0x1d0] sm:$0xff]
    %v427 = vld [vmem:[#allocation8 + $0x1d8] sm:$0xff]
    %v428 = vld [vmem:[#allocation8 + $0x1e0] sm:$0xff]
    %v429 = vld [vmem:[#allocation8 + $0x1e8] sm:$0xff]
    %v430 = vld [vmem:[#allocation8 + $0x1f0] sm:$0xff]
    %v431 = vld [vmem:[#allocation8 + $0x1f8] sm:$0xff]
    %v432 = vld [vmem:[#allocation8 + $0x200] sm:$0xff]
    %v433 = vld [vmem:[#allocation8 + $0x208] sm:$0xff]
    %v434 = vld [vmem:[#allocation8 + $0x210] sm:$0xff]
    %v435 = vld [vmem:[#allocation8 + $0x218] sm:$0xff]
    %v436 = vld [vmem:[#allocation8 + $0x220] sm:$0xff]
    %v437 = vld [vmem:[#allocation8 + $0x228] sm:$0xff]
    %v438 = vld [vmem:[#allocation8 + $0x230] sm:$0xff]
    %v439 = vld [vmem:[#allocation8 + $0x238] sm:$0xff]
    %v440 = vld [vmem:[#allocation8 + $0x240] sm:$0xff]
    %v441 = vld [vmem:[#allocation8 + $0x248] sm:$0xff]
    %v442 = vld [vmem:[#allocation8 + $0x250] sm:$0xff]
    %v443 = vld [vmem:[#allocation8 + $0x258] sm:$0xff]
    %v444 = vld [vmem:[#allocation8 + $0x260] sm:$0xff]
    %v445 = vld [vmem:[#allocation8 + $0x268] sm:$0xff]
    %v446 = vld [vmem:[#allocation8 + $0x270] sm:$0xff]
    %v447 = vld [vmem:[#allocation8 + $0x278] sm:$0xff]
    %v448 = vld [vmem:[#allocation8 + $0x280] sm:$0xff]
    %v449 = vld [vmem:[#allocation8 + $0x288] sm:$0xff]
    %v450 = vld [vmem:[#allocation8 + $0x290] sm:$0xff]
    %v451 = vld [vmem:[#allocation8 + $0x298] sm:$0xff]
    %v452 = vld [vmem:[#allocation8 + $0x2a0] sm:$0xff]
    %v453 = vld [vmem:[#allocation8 + $0x2a8] sm:$0xff]
    %v454 = vld [vmem:[#allocation8 + $0x2b0] sm:$0xff]
    %v455 = vld [vmem:[#allocation8 + $0x2b8] sm:$0xff]
    %v456 = vld [vmem:[#allocation8 + $0x2c0] sm:$0xff]
    %v457 = vld [vmem:[#allocation8 + $0x2c8] sm:$0xff]
    %v458 = vld [vmem:[#allocation8 + $0x2d0] sm:$0xff]
    %v459 = vld [vmem:[#allocation8 + $0x2d8] sm:$0xff]
    %v460 = vld [vmem:[#allocation8 + $0x2e0] sm:$0xff]
    %v461 = vld [vmem:[#allocation8 + $0x2e8] sm:$0xff]
    %v462 = vld [vmem:[#allocation8 + $0x2f0] sm:$0xff]
    %v463 = vld [vmem:[#allocation8 + $0x2f8] sm:$0xff]
    %v464 = vld [vmem:[#allocation8 + $0x300] sm:$0xff]
    %v465 = vld [vmem:[#allocation8 + $0x308] sm:$0xff]
    %v466 = vld [vmem:[#allocation8 + $0x310] sm:$0xff]
    %v467 = vld [vmem:[#allocation8 + $0x318] sm:$0xff]
    %v468 = vld [vmem:[#allocation8 + $0x320] sm:$0xff]
    %v469 = vld [vmem:[#allocation8 + $0x328] sm:$0xff]
    %v470 = vld [vmem:[#allocation8 + $0x330] sm:$0xff]
    %v471 = vld [vmem:[#allocation8 + $0x338] sm:$0xff]
    %v472 = vld [vmem:[#allocation8 + $0x340] sm:$0xff]
    %v473 = vld [vmem:[#allocation8 + $0x348] sm:$0xff]
    %v474 = vld [vmem:[#allocation8 + $0x350] sm:$0xff]
    %v475 = vld [vmem:[#allocation8 + $0x358] sm:$0xff]
    %v476 = vld [vmem:[#allocation8 + $0x360] sm:$0xff]
    %v477 = vld [vmem:[#allocation8 + $0x368] sm:$0xff]
    %v478 = vld [vmem:[#allocation8 + $0x370] sm:$0xff]
    %v479 = vld [vmem:[#allocation8 + $0x378] sm:$0xff]
    %v480 = vld [vmem:[#allocation8 + $0x380] sm:$0xff]
    %v481 = vld [vmem:[#allocation8 + $0x388] sm:$0xff]
    %v482 = vld [vmem:[#allocation8 + $0x390] sm:$0xff]
    %v483 = vld [vmem:[#allocation8 + $0x398] sm:$0xff]
    %v484 = vld [vmem:[#allocation8 + $0x3a0] sm:$0xff]
    %v485 = vld [vmem:[#allocation8 + $0x3a8] sm:$0xff]
    %v486 = vld [vmem:[#allocation8 + $0x3b0] sm:$0xff]
    %v487 = vld [vmem:[#allocation8 + $0x3b8] sm:$0xff]
    %v488 = vld [vmem:[#allocation8 + $0x3c0] sm:$0xff]
    %v489 = vld [vmem:[#allocation8 + $0x3c8] sm:$0xff]
    %v490 = vld [vmem:[#allocation8 + $0x3d0] sm:$0xff]
    %v491 = vld [vmem:[#allocation8 + $0x3d8] sm:$0xff]
    %v492 = vld [vmem:[#allocation8 + $0x3e0] sm:$0xff]
    %v493 = vld [vmem:[#allocation8 + $0x3e8] sm:$0xff]
    %v494 = vld [vmem:[#allocation8 + $0x3f0] sm:$0xff]
    %v495 = vld [vmem:[#allocation8 + $0x3f8] sm:$0xff]
    %v496 = vld [vmem:[#allocation10] sm:$0xff]
    loop: start=0, step=1, limit=80
    $region54: #{tpu_custom_call.1} parent=1 // loop_pre_header
      _
    $region55: #{tpu_custom_call.1} parent=1 // loop_header
      %s498 = sphi 0, %s502
      %p499 = scmp.ge.s32.totalorder %s498, 80
      %v503 = vphi 0.0, %v1400
      %v504 = vphi 0.0, %v1398
      %v505 = vphi 0.0, %v3119
      %v506 = vphi 0.0, %v3120
      %v507 = vphi 0.0, %v3115
      %v508 = vphi 0.0, %v3116
    $region56: #{tpu_custom_call.1} parent=1 // loop_header_branch
      %501 = sbr.rel (%p499) target = $region60
    $region57: #{tpu_custom_call.1} parent=1 // loop_body
      %s509 = smul.u32 %s498, 8
      %s510 = smul.addr %s509, 2
      %s511 = scalar_lea.vmem [#allocation2], %s510
      %v512 = vld [vmem:[%s511] sm:$0xff]
      %v513 = vld [vmem:[%s511 + $0x8] sm:$0xff]
      %v516 = vunpack.c.l.s4 1983009808
      %v517 = vunpack.c.0.s8 %v516
      %v518 = vlaneseq
      %v519 = vshrl.u32 %v518, 7
      %v520 = vsub.s32 %v517, %v519
      %v521 = vrot.slane %v503, %v520
      %v522 = vcombine.high %v521, %v521
      %v525 = vpack.c.bf16 %v521, %v521
      %v526 = vpack.c.bf16 %v522, %v522
      %v655 = vunpack.c.l.b16 %v112
      %v656 = vunpack.c.h.b16 %v112
      %v657 = vunpack.c.l.b16 %v113
      %v658 = vunpack.c.h.b16 %v113
      %v659 = vunpack.c.l.b16 %v114
      %v660 = vunpack.c.h.b16 %v114
      %v661 = vunpack.c.l.b16 %v115
      %v662 = vunpack.c.h.b16 %v115
      %v663 = vunpack.c.l.b16 %v116
      %v664 = vunpack.c.h.b16 %v116
      %v665 = vunpack.c.l.b16 %v117
      %v666 = vunpack.c.h.b16 %v117
      %v667 = vunpack.c.l.b16 %v118
      %v668 = vunpack.c.h.b16 %v118
      %v669 = vunpack.c.l.b16 %v119
      %v670 = vunpack.c.h.b16 %v119
      %v671 = vunpack.c.l.b16 %v120
      %v672 = vunpack.c.h.b16 %v120
      %v673 = vunpack.c.l.b16 %v121
      %v674 = vunpack.c.h.b16 %v121
      %v675 = vunpack.c.l.b16 %v122
      %v676 = vunpack.c.h.b16 %v122
      %v677 = vunpack.c.l.b16 %v123
      %v678 = vunpack.c.h.b16 %v123
      %v679 = vunpack.c.l.b16 %v124
      %v680 = vunpack.c.h.b16 %v124
      %v681 = vunpack.c.l.b16 %v125
      %v682 = vunpack.c.h.b16 %v125
      %v683 = vunpack.c.l.b16 %v126
      %v684 = vunpack.c.h.b16 %v126
      %v685 = vunpack.c.l.b16 %v127
      %v686 = vunpack.c.h.b16 %v127
      %v687 = vunpack.c.l.b16 %v128
      %v688 = vunpack.c.h.b16 %v128
      %v689 = vunpack.c.l.b16 %v129
      %v690 = vunpack.c.h.b16 %v129
      %v691 = vunpack.c.l.b16 %v130
      %v692 = vunpack.c.h.b16 %v130
      %v693 = vunpack.c.l.b16 %v131
      %v694 = vunpack.c.h.b16 %v131
      %v695 = vunpack.c.l.b16 %v132
      %v696 = vunpack.c.h.b16 %v132
      %v697 = vunpack.c.l.b16 %v133
      %v698 = vunpack.c.h.b16 %v133
      %v699 = vunpack.c.l.b16 %v134
      %v700 = vunpack.c.h.b16 %v134
      %v701 = vunpack.c.l.b16 %v135
      %v702 = vunpack.c.h.b16 %v135
      %v703 = vunpack.c.l.b16 %v136
      %v704 = vunpack.c.h.b16 %v136
      %v705 = vunpack.c.l.b16 %v137
      %v706 = vunpack.c.h.b16 %v137
      %v707 = vunpack.c.l.b16 %v138
      %v708 = vunpack.c.h.b16 %v138
      %v709 = vunpack.c.l.b16 %v139
      %v710 = vunpack.c.h.b16 %v139
      %v711 = vunpack.c.l.b16 %v140
      %v712 = vunpack.c.h.b16 %v140
      %v713 = vunpack.c.l.b16 %v141
      %v714 = vunpack.c.h.b16 %v141
      %v715 = vunpack.c.l.b16 %v142
      %v716 = vunpack.c.h.b16 %v142
      %v717 = vunpack.c.l.b16 %v143
      %v718 = vunpack.c.h.b16 %v143
      %v719 = vunpack.c.l.b16 %v144
      %v720 = vunpack.c.h.b16 %v144
      %v721 = vunpack.c.l.b16 %v145
      %v722 = vunpack.c.h.b16 %v145
      %v723 = vunpack.c.l.b16 %v146
      %v724 = vunpack.c.h.b16 %v146
      %v725 = vunpack.c.l.b16 %v147
      %v726 = vunpack.c.h.b16 %v147
      %v727 = vunpack.c.l.b16 %v148
      %v728 = vunpack.c.h.b16 %v148
      %v729 = vunpack.c.l.b16 %v149
      %v730 = vunpack.c.h.b16 %v149
      %v731 = vunpack.c.l.b16 %v150
      %v732 = vunpack.c.h.b16 %v150
      %v733 = vunpack.c.l.b16 %v151
      %v734 = vunpack.c.h.b16 %v151
      %v735 = vunpack.c.l.b16 %v152
      %v736 = vunpack.c.h.b16 %v152
      %v737 = vunpack.c.l.b16 %v153
      %v738 = vunpack.c.h.b16 %v153
      %v739 = vunpack.c.l.b16 %v154
      %v740 = vunpack.c.h.b16 %v154
      %v741 = vunpack.c.l.b16 %v155
      %v742 = vunpack.c.h.b16 %v155
      %v743 = vunpack.c.l.b16 %v156
      %v744 = vunpack.c.h.b16 %v156
      %v745 = vunpack.c.l.b16 %v157
      %v746 = vunpack.c.h.b16 %v157
      %v747 = vunpack.c.l.b16 %v158
      %v748 = vunpack.c.h.b16 %v158
      %v749 = vunpack.c.l.b16 %v159
      %v750 = vunpack.c.h.b16 %v159
      %v751 = vunpack.c.l.b16 %v160
      %v752 = vunpack.c.h.b16 %v160
      %v753 = vunpack.c.l.b16 %v161
      %v754 = vunpack.c.h.b16 %v161
      %v755 = vunpack.c.l.b16 %v162
      %v756 = vunpack.c.h.b16 %v162
      %v757 = vunpack.c.l.b16 %v163
      %v758 = vunpack.c.h.b16 %v163
      %v759 = vunpack.c.l.b16 %v164
      %v760 = vunpack.c.h.b16 %v164
      %v761 = vunpack.c.l.b16 %v165
      %v762 = vunpack.c.h.b16 %v165
      %v763 = vunpack.c.l.b16 %v166
      %v764 = vunpack.c.h.b16 %v166
      %v765 = vunpack.c.l.b16 %v167
      %v766 = vunpack.c.h.b16 %v167
      %v767 = vunpack.c.l.b16 %v168
      %v768 = vunpack.c.h.b16 %v168
      %v769 = vunpack.c.l.b16 %v169
      %v770 = vunpack.c.h.b16 %v169
      %v771 = vunpack.c.l.b16 %v170
      %v772 = vunpack.c.h.b16 %v170
      %v773 = vunpack.c.l.b16 %v171
      %v774 = vunpack.c.h.b16 %v171
      %v775 = vunpack.c.l.b16 %v172
      %v776 = vunpack.c.h.b16 %v172
      %v777 = vunpack.c.l.b16 %v173
      %v778 = vunpack.c.h.b16 %v173
      %v779 = vunpack.c.l.b16 %v174
      %v780 = vunpack.c.h.b16 %v174
      %v781 = vunpack.c.l.b16 %v175
      %v782 = vunpack.c.h.b16 %v175
      %v783 = vunpack.c.l.b16 %v176
      %v784 = vunpack.c.h.b16 %v176
      %v785 = vunpack.c.l.b16 %v177
      %v786 = vunpack.c.h.b16 %v177
      %v787 = vunpack.c.l.b16 %v178
      %v788 = vunpack.c.h.b16 %v178
      %v789 = vunpack.c.l.b16 %v179
      %v790 = vunpack.c.h.b16 %v179
      %v791 = vunpack.c.l.b16 %v180
      %v792 = vunpack.c.h.b16 %v180
      %v793 = vunpack.c.l.b16 %v181
      %v794 = vunpack.c.h.b16 %v181
      %v795 = vunpack.c.l.b16 %v182
      %v796 = vunpack.c.h.b16 %v182
      %v797 = vunpack.c.l.b16 %v183
      %v798 = vunpack.c.h.b16 %v183
      %v799 = vunpack.c.l.b16 %v184
      %v800 = vunpack.c.h.b16 %v184
      %v801 = vunpack.c.l.b16 %v185
      %v802 = vunpack.c.h.b16 %v185
      %v803 = vunpack.c.l.b16 %v186
      %v804 = vunpack.c.h.b16 %v186
      %v805 = vunpack.c.l.b16 %v187
      %v806 = vunpack.c.h.b16 %v187
      %v807 = vunpack.c.l.b16 %v188
      %v808 = vunpack.c.h.b16 %v188
      %v809 = vunpack.c.l.b16 %v189
      %v810 = vunpack.c.h.b16 %v189
      %v811 = vunpack.c.l.b16 %v190
      %v812 = vunpack.c.h.b16 %v190
      %v813 = vunpack.c.l.b16 %v191
      %v814 = vunpack.c.h.b16 %v191
      %v815 = vunpack.c.l.b16 %v192
      %v816 = vunpack.c.h.b16 %v192
      %v817 = vunpack.c.l.b16 %v193
      %v818 = vunpack.c.h.b16 %v193
      %v819 = vunpack.c.l.b16 %v194
      %v820 = vunpack.c.h.b16 %v194
      %v821 = vunpack.c.l.b16 %v195
      %v822 = vunpack.c.h.b16 %v195
      %v823 = vunpack.c.l.b16 %v196
      %v824 = vunpack.c.h.b16 %v196
      %v825 = vunpack.c.l.b16 %v197
      %v826 = vunpack.c.h.b16 %v197
      %v827 = vunpack.c.l.b16 %v198
      %v828 = vunpack.c.h.b16 %v198
      %v829 = vunpack.c.l.b16 %v199
      %v830 = vunpack.c.h.b16 %v199
      %v831 = vunpack.c.l.b16 %v200
      %v832 = vunpack.c.h.b16 %v200
      %v833 = vunpack.c.l.b16 %v201
      %v834 = vunpack.c.h.b16 %v201
      %v835 = vunpack.c.l.b16 %v202
      %v836 = vunpack.c.h.b16 %v202
      %v837 = vunpack.c.l.b16 %v203
      %v838 = vunpack.c.h.b16 %v203
      %v839 = vunpack.c.l.b16 %v204
      %v840 = vunpack.c.h.b16 %v204
      %v841 = vunpack.c.l.b16 %v205
      %v842 = vunpack.c.h.b16 %v205
      %v843 = vunpack.c.l.b16 %v206
      %v844 = vunpack.c.h.b16 %v206
      %v845 = vunpack.c.l.b16 %v207
      %v846 = vunpack.c.h.b16 %v207
      %v847 = vunpack.c.l.b16 %v208
      %v848 = vunpack.c.h.b16 %v208
      %v849 = vunpack.c.l.b16 %v209
      %v850 = vunpack.c.h.b16 %v209
      %v851 = vunpack.c.l.b16 %v210
      %v852 = vunpack.c.h.b16 %v210
      %v853 = vunpack.c.l.b16 %v211
      %v854 = vunpack.c.h.b16 %v211
      %v855 = vunpack.c.l.b16 %v212
      %v856 = vunpack.c.h.b16 %v212
      %v857 = vunpack.c.l.b16 %v213
      %v858 = vunpack.c.h.b16 %v213
      %v859 = vunpack.c.l.b16 %v214
      %v860 = vunpack.c.h.b16 %v214
      %v861 = vunpack.c.l.b16 %v215
      %v862 = vunpack.c.h.b16 %v215
      %v863 = vunpack.c.l.b16 %v216
      %v864 = vunpack.c.h.b16 %v216
      %v865 = vunpack.c.l.b16 %v217
      %v866 = vunpack.c.h.b16 %v217
      %v867 = vunpack.c.l.b16 %v218
      %v868 = vunpack.c.h.b16 %v218
      %v869 = vunpack.c.l.b16 %v219
      %v870 = vunpack.c.h.b16 %v219
      %v871 = vunpack.c.l.b16 %v220
      %v872 = vunpack.c.h.b16 %v220
      %v873 = vunpack.c.l.b16 %v221
      %v874 = vunpack.c.h.b16 %v221
      %v875 = vunpack.c.l.b16 %v222
      %v876 = vunpack.c.h.b16 %v222
      %v877 = vunpack.c.l.b16 %v223
      %v878 = vunpack.c.h.b16 %v223
      %v879 = vunpack.c.l.b16 %v224
      %v880 = vunpack.c.h.b16 %v224
      %v881 = vunpack.c.l.b16 %v225
      %v882 = vunpack.c.h.b16 %v225
      %v883 = vunpack.c.l.b16 %v226
      %v884 = vunpack.c.h.b16 %v226
      %v885 = vunpack.c.l.b16 %v227
      %v886 = vunpack.c.h.b16 %v227
      %v887 = vunpack.c.l.b16 %v228
      %v888 = vunpack.c.h.b16 %v228
      %v889 = vunpack.c.l.b16 %v229
      %v890 = vunpack.c.h.b16 %v229
      %v891 = vunpack.c.l.b16 %v230
      %v892 = vunpack.c.h.b16 %v230
      %v893 = vunpack.c.l.b16 %v231
      %v894 = vunpack.c.h.b16 %v231
      %v895 = vunpack.c.l.b16 %v232
      %v896 = vunpack.c.h.b16 %v232
      %v897 = vunpack.c.l.b16 %v233
      %v898 = vunpack.c.h.b16 %v233
      %v899 = vunpack.c.l.b16 %v234
      %v900 = vunpack.c.h.b16 %v234
      %v901 = vunpack.c.l.b16 %v235
      %v902 = vunpack.c.h.b16 %v235
      %v903 = vunpack.c.l.b16 %v236
      %v904 = vunpack.c.h.b16 %v236
      %v905 = vunpack.c.l.b16 %v237
      %v906 = vunpack.c.h.b16 %v237
      %v907 = vunpack.c.l.b16 %v238
      %v908 = vunpack.c.h.b16 %v238
      %v909 = vunpack.c.l.b16 %v239
      %v910 = vunpack.c.h.b16 %v239
      %v911 = vpack.c.b16 %v663, %v655
      %v912 = vpack.c.b16 %v664, %v656
      %v913 = vpack.c.b16 %v665, %v657
      %v914 = vpack.c.b16 %v666, %v658
      %v915 = vpack.c.b16 %v667, %v659
      %v916 = vpack.c.b16 %v668, %v660
      %v917 = vpack.c.b16 %v669, %v661
      %v918 = vpack.c.b16 %v670, %v662
      %v919 = vpack.c.b16 %v679, %v671
      %v920 = vpack.c.b16 %v680, %v672
      %v921 = vpack.c.b16 %v681, %v673
      %v922 = vpack.c.b16 %v682, %v674
      %v923 = vpack.c.b16 %v683, %v675
      %v924 = vpack.c.b16 %v684, %v676
      %v925 = vpack.c.b16 %v685, %v677
      %v926 = vpack.c.b16 %v686, %v678
      %v927 = vpack.c.b16 %v695, %v687
      %v928 = vpack.c.b16 %v696, %v688
      %v929 = vpack.c.b16 %v697, %v689
      %v930 = vpack.c.b16 %v698, %v690
      %v931 = vpack.c.b16 %v699, %v691
      %v932 = vpack.c.b16 %v700, %v692
      %v933 = vpack.c.b16 %v701, %v693
      %v934 = vpack.c.b16 %v702, %v694
      %v935 = vpack.c.b16 %v711, %v703
      %v936 = vpack.c.b16 %v712, %v704
      %v937 = vpack.c.b16 %v713, %v705
      %v938 = vpack.c.b16 %v714, %v706
      %v939 = vpack.c.b16 %v715, %v707
      %v940 = vpack.c.b16 %v716, %v708
      %v941 = vpack.c.b16 %v717, %v709
      %v942 = vpack.c.b16 %v718, %v710
      %v943 = vpack.c.b16 %v727, %v719
      %v944 = vpack.c.b16 %v728, %v720
      %v945 = vpack.c.b16 %v729, %v721
      %v946 = vpack.c.b16 %v730, %v722
      %v947 = vpack.c.b16 %v731, %v723
      %v948 = vpack.c.b16 %v732, %v724
      %v949 = vpack.c.b16 %v733, %v725
      %v950 = vpack.c.b16 %v734, %v726
      %v951 = vpack.c.b16 %v743, %v735
      %v952 = vpack.c.b16 %v744, %v736
      %v953 = vpack.c.b16 %v745, %v737
      %v954 = vpack.c.b16 %v746, %v738
      %v955 = vpack.c.b16 %v747, %v739
      %v956 = vpack.c.b16 %v748, %v740
      %v957 = vpack.c.b16 %v749, %v741
      %v958 = vpack.c.b16 %v750, %v742
      %v959 = vpack.c.b16 %v759, %v751
      %v960 = vpack.c.b16 %v760, %v752
      %v961 = vpack.c.b16 %v761, %v753
      %v962 = vpack.c.b16 %v762, %v754
      %v963 = vpack.c.b16 %v763, %v755
      %v964 = vpack.c.b16 %v764, %v756
      %v965 = vpack.c.b16 %v765, %v757
      %v966 = vpack.c.b16 %v766, %v758
      %v967 = vpack.c.b16 %v775, %v767
      %v968 = vpack.c.b16 %v776, %v768
      %v969 = vpack.c.b16 %v777, %v769
      %v970 = vpack.c.b16 %v778, %v770
      %v971 = vpack.c.b16 %v779, %v771
      %v972 = vpack.c.b16 %v780, %v772
      %v973 = vpack.c.b16 %v781, %v773
      %v974 = vpack.c.b16 %v782, %v774
      %v975 = vpack.c.b16 %v791, %v783
      %v976 = vpack.c.b16 %v792, %v784
      %v977 = vpack.c.b16 %v793, %v785
      %v978 = vpack.c.b16 %v794, %v786
      %v979 = vpack.c.b16 %v795, %v787
      %v980 = vpack.c.b16 %v796, %v788
      %v981 = vpack.c.b16 %v797, %v789
      %v982 = vpack.c.b16 %v798, %v790
      %v983 = vpack.c.b16 %v807, %v799
      %v984 = vpack.c.b16 %v808, %v800
      %v985 = vpack.c.b16 %v809, %v801
      %v986 = vpack.c.b16 %v810, %v802
      %v987 = vpack.c.b16 %v811, %v803
      %v988 = vpack.c.b16 %v812, %v804
      %v989 = vpack.c.b16 %v813, %v805
      %v990 = vpack.c.b16 %v814, %v806
      %v991 = vpack.c.b16 %v823, %v815
      %v992 = vpack.c.b16 %v824, %v816
      %v993 = vpack.c.b16 %v825, %v817
      %v994 = vpack.c.b16 %v826, %v818
      %v995 = vpack.c.b16 %v827, %v819
      %v996 = vpack.c.b16 %v828, %v820
      %v997 = vpack.c.b16 %v829, %v821
      %v998 = vpack.c.b16 %v830, %v822
      %v999 = vpack.c.b16 %v839, %v831
      %v1000 = vpack.c.b16 %v840, %v832
      %v1001 = vpack.c.b16 %v841, %v833
      %v1002 = vpack.c.b16 %v842, %v834
      %v1003 = vpack.c.b16 %v843, %v835
      %v1004 = vpack.c.b16 %v844, %v836
      %v1005 = vpack.c.b16 %v845, %v837
      %v1006 = vpack.c.b16 %v846, %v838
      %v1007 = vpack.c.b16 %v855, %v847
      %v1008 = vpack.c.b16 %v856, %v848
      %v1009 = vpack.c.b16 %v857, %v849
      %v1010 = vpack.c.b16 %v858, %v850
      %v1011 = vpack.c.b16 %v859, %v851
      %v1012 = vpack.c.b16 %v860, %v852
      %v1013 = vpack.c.b16 %v861, %v853
      %v1014 = vpack.c.b16 %v862, %v854
      %v1015 = vpack.c.b16 %v871, %v863
      %v1016 = vpack.c.b16 %v872, %v864
      %v1017 = vpack.c.b16 %v873, %v865
      %v1018 = vpack.c.b16 %v874, %v866
      %v1019 = vpack.c.b16 %v875, %v867
      %v1020 = vpack.c.b16 %v876, %v868
      %v1021 = vpack.c.b16 %v877, %v869
      %v1022 = vpack.c.b16 %v878, %v870
      %v1023 = vpack.c.b16 %v887, %v879
      %v1024 = vpack.c.b16 %v888, %v880
      %v1025 = vpack.c.b16 %v889, %v881
      %v1026 = vpack.c.b16 %v890, %v882
      %v1027 = vpack.c.b16 %v891, %v883
      %v1028 = vpack.c.b16 %v892, %v884
      %v1029 = vpack.c.b16 %v893, %v885
      %v1030 = vpack.c.b16 %v894, %v886
      %v1031 = vpack.c.b16 %v903, %v895
      %v1032 = vpack.c.b16 %v904, %v896
      %v1033 = vpack.c.b16 %v905, %v897
      %v1034 = vpack.c.b16 %v906, %v898
      %v1035 = vpack.c.b16 %v907, %v899
      %v1036 = vpack.c.b16 %v908, %v900
      %v1037 = vpack.c.b16 %v909, %v901
      %v1038 = vpack.c.b16 %v910, %v902
      %1167 = vmatprep.subr.bf16.mxu0 %v968
      %1168 = vmatpush1.bf16.msra.mxu0 %v967
      %1169 = vmatprep.subr.bf16.mxu0 %v960
      %1170 = vmatpush1.bf16.msra.mxu0 %v959
      %1171 = vmatprep.subr.bf16.mxu0 %v952
      %1172 = vmatpush1.bf16.msra.mxu0 %v951
      %1173 = vmatprep.subr.bf16.mxu0 %v944
      %1174 = vmatpush1.bf16.msra.mxu0 %v943
      %1175 = vmatprep.subr.bf16.mxu0 %v936
      %1176 = vmatpush1.bf16.msra.mxu0 %v935
      %1177 = vmatprep.subr.bf16.mxu0 %v928
      %1178 = vmatpush1.bf16.msra.mxu0 %v927
      %1179 = vmatprep.subr.bf16.mxu0 %v920
      %1180 = vmatpush1.bf16.msra.mxu0 %v919
      %1181 = vmatprep.subr.bf16.mxu0 %v912
      %1182 = vmatpush1.bf16.msra.mxu0 %v911
      %1183 = vmatprep.subr.bf16.mxu0 %v1032
      %1184 = vmatpush2.bf16.msra.mxu0 %v1031
      %1185 = vmatprep.subr.bf16.mxu0 %v1024
      %1186 = vmatpush2.bf16.msra.mxu0 %v1023
      %1187 = vmatprep.subr.bf16.mxu0 %v1016
      %1188 = vmatpush2.bf16.msra.mxu0 %v1015
      %1189 = vmatprep.subr.bf16.mxu0 %v1008
      %1190 = vmatpush2.bf16.msra.mxu0 %v1007
      %1191 = vmatprep.subr.bf16.mxu0 %v1000
      %1192 = vmatpush2.bf16.msra.mxu0 %v999
      %1193 = vmatprep.subr.bf16.mxu0 %v992
      %1194 = vmatpush2.bf16.msra.mxu0 %v991
      %1195 = vmatprep.subr.bf16.mxu0 %v984
      %1196 = vmatpush2.bf16.msra.mxu0 %v983
      %1197 = vmatprep.subr.bf16.mxu0 %v976
      %1198 = vmatpush2.bf16.msra.mxu0 %v975
      %1199 = vmatprep.mubr.bf16.mxu0 %v526
      %1200 = vmatmul.mubr.bf16.gmra.mxu0 %v525
      %v1201 = vpop.f32.mrf.mxu0
      %v1202 = vadd.f32 0.0, %v1201
      %v1203 = vpop.f32.mrf.mxu0
      %v1204 = vadd.f32 0.0, %v1203
      %v1205 = vpop.f32.mrf.mxu0
      %v1206 = vpop.f32.mrf.mxu0
      %1207 = vdwg.mxu0
      %1208 = vmatprep.subr.bf16.mxu0 %v970
      %1209 = vmatpush1.bf16.msra.mxu0 %v969
      %1210 = vmatprep.subr.bf16.mxu0 %v962
      %1211 = vmatpush1.bf16.msra.mxu0 %v961
      %1212 = vmatprep.subr.bf16.mxu0 %v954
      %1213 = vmatpush1.bf16.msra.mxu0 %v953
      %1214 = vmatprep.subr.bf16.mxu0 %v946
      %1215 = vmatpush1.bf16.msra.mxu0 %v945
      %1216 = vmatprep.subr.bf16.mxu0 %v938
      %1217 = vmatpush1.bf16.msra.mxu0 %v937
      %1218 = vmatprep.subr.bf16.mxu0 %v930
      %1219 = vmatpush1.bf16.msra.mxu0 %v929
      %1220 = vmatprep.subr.bf16.mxu0 %v922
      %1221 = vmatpush1.bf16.msra.mxu0 %v921
      %1222 = vmatprep.subr.bf16.mxu0 %v914
      %1223 = vmatpush1.bf16.msra.mxu0 %v913
      %1224 = vmatprep.subr.bf16.mxu0 %v1034
      %1225 = vmatpush2.bf16.msra.mxu0 %v1033
      %1226 = vmatprep.subr.bf16.mxu0 %v1026
      %1227 = vmatpush2.bf16.msra.mxu0 %v1025
      %1228 = vmatprep.subr.bf16.mxu0 %v1018
      %1229 = vmatpush2.bf16.msra.mxu0 %v1017
      %1230 = vmatprep.subr.bf16.mxu0 %v1010
      %1231 = vmatpush2.bf16.msra.mxu0 %v1009
      %1232 = vmatprep.subr.bf16.mxu0 %v1002
      %1233 = vmatpush2.bf16.msra.mxu0 %v1001
      %1234 = vmatprep.subr.bf16.mxu0 %v994
      %1235 = vmatpush2.bf16.msra.mxu0 %v993
      %1236 = vmatprep.subr.bf16.mxu0 %v986
      %1237 = vmatpush2.bf16.msra.mxu0 %v985
      %1238 = vmatprep.subr.bf16.mxu0 %v978
      %1239 = vmatpush2.bf16.msra.mxu0 %v977
      %1240 = vmatprep.mubr.bf16.mxu0 %v526
      %1241 = vmatmul.mubr.bf16.gmra.mxu0 %v525
      %v1242 = vpop.f32.mrf.mxu0
      %v1243 = vadd.f32 0.0, %v1242
      %v1244 = vpop.f32.mrf.mxu0
      %v1245 = vadd.f32 0.0, %v1244
      %v1246 = vpop.f32.mrf.mxu0
      %v1247 = vpop.f32.mrf.mxu0
      %1248 = vdwg.mxu0
      %1249 = vmatprep.subr.bf16.mxu0 %v972
      %1250 = vmatpush1.bf16.msra.mxu0 %v971
      %1251 = vmatprep.subr.bf16.mxu0 %v964
      %1252 = vmatpush1.bf16.msra.mxu0 %v963
      %1253 = vmatprep.subr.bf16.mxu0 %v956
      %1254 = vmatpush1.bf16.msra.mxu0 %v955
      %1255 = vmatprep.subr.bf16.mxu0 %v948
      %1256 = vmatpush1.bf16.msra.mxu0 %v947
      %1257 = vmatprep.subr.bf16.mxu0 %v940
      %1258 = vmatpush1.bf16.msra.mxu0 %v939
      %1259 = vmatprep.subr.bf16.mxu0 %v932
      %1260 = vmatpush1.bf16.msra.mxu0 %v931
      %1261 = vmatprep.subr.bf16.mxu0 %v924
      %1262 = vmatpush1.bf16.msra.mxu0 %v923
      %1263 = vmatprep.subr.bf16.mxu0 %v916
      %1264 = vmatpush1.bf16.msra.mxu0 %v915
      %1265 = vmatprep.subr.bf16.mxu0 %v1036
      %1266 = vmatpush2.bf16.msra.mxu0 %v1035
      %1267 = vmatprep.subr.bf16.mxu0 %v1028
      %1268 = vmatpush2.bf16.msra.mxu0 %v1027
      %1269 = vmatprep.subr.bf16.mxu0 %v1020
      %1270 = vmatpush2.bf16.msra.mxu0 %v1019
      %1271 = vmatprep.subr.bf16.mxu0 %v1012
      %1272 = vmatpush2.bf16.msra.mxu0 %v1011
      %1273 = vmatprep.subr.bf16.mxu0 %v1004
      %1274 = vmatpush2.bf16.msra.mxu0 %v1003
      %1275 = vmatprep.subr.bf16.mxu0 %v996
      %1276 = vmatpush2.bf16.msra.mxu0 %v995
      %1277 = vmatprep.subr.bf16.mxu0 %v988
      %1278 = vmatpush2.bf16.msra.mxu0 %v987
      %1279 = vmatprep.subr.bf16.mxu0 %v980
      %1280 = vmatpush2.bf16.msra.mxu0 %v979
      %1281 = vmatprep.mubr.bf16.mxu0 %v526
      %1282 = vmatmul.mubr.bf16.gmra.mxu0 %v525
      %v1283 = vpop.f32.mrf.mxu0
      %v1284 = vadd.f32 0.0, %v1283
      %v1285 = vpop.f32.mrf.mxu0
      %v1286 = vadd.f32 0.0, %v1285
      %v1287 = vpop.f32.mrf.mxu0
      %v1288 = vpop.f32.mrf.mxu0
      %1289 = vdwg.mxu0
      %1290 = vmatprep.subr.bf16.mxu0 %v974
      %1291 = vmatpush1.bf16.msra.mxu0 %v973
      %1292 = vmatprep.subr.bf16.mxu0 %v966
      %1293 = vmatpush1.bf16.msra.mxu0 %v965
      %1294 = vmatprep.subr.bf16.mxu0 %v958
      %1295 = vmatpush1.bf16.msra.mxu0 %v957
      %1296 = vmatprep.subr.bf16.mxu0 %v950
      %1297 = vmatpush1.bf16.msra.mxu0 %v949
      %1298 = vmatprep.subr.bf16.mxu0 %v942
      %1299 = vmatpush1.bf16.msra.mxu0 %v941
      %1300 = vmatprep.subr.bf16.mxu0 %v934
      %1301 = vmatpush1.bf16.msra.mxu0 %v933
      %1302 = vmatprep.subr.bf16.mxu0 %v926
      %1303 = vmatpush1.bf16.msra.mxu0 %v925
      %1304 = vmatprep.subr.bf16.mxu0 %v918
      %1305 = vmatpush1.bf16.msra.mxu0 %v917
      %1306 = vmatprep.subr.bf16.mxu0 %v1038
      %1307 = vmatpush2.bf16.msra.mxu0 %v1037
      %1308 = vmatprep.subr.bf16.mxu0 %v1030
      %1309 = vmatpush2.bf16.msra.mxu0 %v1029
      %1310 = vmatprep.subr.bf16.mxu0 %v1022
      %1311 = vmatpush2.bf16.msra.mxu0 %v1021
      %1312 = vmatprep.subr.bf16.mxu0 %v1014
      %1313 = vmatpush2.bf16.msra.mxu0 %v1013
      %1314 = vmatprep.subr.bf16.mxu0 %v1006
      %1315 = vmatpush2.bf16.msra.mxu0 %v1005
      %1316 = vmatprep.subr.bf16.mxu0 %v998
      %1317 = vmatpush2.bf16.msra.mxu0 %v997
      %1318 = vmatprep.subr.bf16.mxu0 %v990
      %1319 = vmatpush2.bf16.msra.mxu0 %v989
      %1320 = vmatprep.subr.bf16.mxu0 %v982
      %1321 = vmatpush2.bf16.msra.mxu0 %v981
      %1322 = vmatprep.mubr.bf16.mxu0 %v526
      %1323 = vmatmul.mubr.bf16.gmra.mxu0 %v525
      %v1324 = vpop.f32.mrf.mxu0
      %v1325 = vadd.f32 0.0, %v1324
      %v1326 = vpop.f32.mrf.mxu0
      %v1327 = vadd.f32 0.0, %v1326
      %v1328 = vpop.f32.mrf.mxu0
      %v1329 = vpop.f32.mrf.mxu0
      %1330 = vdwg.mxu0
      %v1339 = vcombine.low %v1202, %v1204
      %v1340 = vcombine.low %v1243, %v1245
      %v1342 = vunpack.c.l.s4 1983009808
      %v1343 = vunpack.c.0.s8 %v1342
      %v1344 = vlaneseq
      %v1345 = vshrl.u32 %v1344, 7
      %v1346 = vsub.s32 %v1343, %v1345
      %v1347 = vrot.slane %v1339, %v1346
      %v1349 = vunpack.c.l.s4 1983009808
      %v1350 = vunpack.c.0.s8 %v1349
      %v1351 = vlaneseq
      %v1352 = vshrl.u32 %v1351, 7
      %v1353 = vsub.s32 %v1350, %v1352
      %v1354 = vrot.slane %v1340, %v1353
      %v1355 = vcombine.low %v1347, %v1354
      %v1356 = vcombine.low %v1284, %v1286
      %v1357 = vcombine.low %v1325, %v1327
      %v1359 = vunpack.c.l.s4 1983009808
      %v1360 = vunpack.c.0.s8 %v1359
      %v1361 = vlaneseq
      %v1362 = vshrl.u32 %v1361, 7
      %v1363 = vsub.s32 %v1360, %v1362
      %v1364 = vrot.slane %v1356, %v1363
      %v1366 = vunpack.c.l.s4 1983009808
      %v1367 = vunpack.c.0.s8 %v1366
      %v1368 = vlaneseq
      %v1369 = vshrl.u32 %v1368, 7
      %v1370 = vsub.s32 %v1367, %v1369
      %v1371 = vrot.slane %v1357, %v1370
      %v1372 = vcombine.low %v1364, %v1371
      %v1375 = vadd.f32 %v512, %v1355
      %v1376 = vadd.f32 %v513, %v1372
      %v1377 = vxor.u32 %v1375, 2147483648
      %v1378 = vxor.u32 %v1376, 2147483648
      %v1379 = vmul.f32 %v1377, 1.442695
      %v1380 = vpow.pop %v1379
      %v1381 = vmul.f32 %v1378, 1.442695
      %v1382 = vpow.pop %v1381
      %v1383 = vadd.f32 %v1380, 1.0
      %v1384 = vadd.f32 %v1382, 1.0
      %v1385 = vrcp.pop %v1383
      %v1386 = vmul.f32 1.0, %v1385
      %v1387 = vrcp.pop %v1384
      %v1388 = vmul.f32 1.0, %v1387
      %v1390 = vrot.slane %v1376, 4
      %v1392 = vtanh.pop %v1390
      %v1394 = vrot.slane %v1386, 4
      %v1396 = vmul.f32 %v1394, %v504
      %v1397 = vmul.f32 %v1386, %v1392
      %v1398 = vadd.f32 %v1396, %v1397
      %v1399 = vtanh.pop %v1398
      %v1400 = vmul.f32 %v1388, %v1399
      %v1403 = vunpack.c.l.s4 1983009808
      %v1404 = vunpack.c.0.s8 %v1403
      %v1405 = vlaneseq
      %v1406 = vshrl.u32 %v1405, 7
      %v1407 = vsub.s32 %v1404, %v1406
      %v1408 = vrot.slane %v1400, %v1407
      %v1409 = vcombine.high %v1408, %v1408
      %v1412 = vpack.c.bf16 %v1408, %v1408
      %v1413 = vpack.c.bf16 %v1409, %v1409
      %v1414 = vpack.c.bf16 %v505, %v505
      %v1415 = vpack.c.bf16 %v506, %v506
      %v1544 = vunpack.c.l.b16 %v368
      %v1545 = vunpack.c.h.b16 %v368
      %v1546 = vunpack.c.l.b16 %v369
      %v1547 = vunpack.c.h.b16 %v369
      %v1548 = vunpack.c.l.b16 %v370
      %v1549 = vunpack.c.h.b16 %v370
      %v1550 = vunpack.c.l.b16 %v371
      %v1551 = vunpack.c.h.b16 %v371
      %v1552 = vunpack.c.l.b16 %v372
      %v1553 = vunpack.c.h.b16 %v372
      %v1554 = vunpack.c.l.b16 %v373
      %v1555 = vunpack.c.h.b16 %v373
      %v1556 = vunpack.c.l.b16 %v374
      %v1557 = vunpack.c.h.b16 %v374
      %v1558 = vunpack.c.l.b16 %v375
      %v1559 = vunpack.c.h.b16 %v375
      %v1560 = vunpack.c.l.b16 %v376
      %v1561 = vunpack.c.h.b16 %v376
      %v1562 = vunpack.c.l.b16 %v377
      %v1563 = vunpack.c.h.b16 %v377
      %v1564 = vunpack.c.l.b16 %v378
      %v1565 = vunpack.c.h.b16 %v378
      %v1566 = vunpack.c.l.b16 %v379
      %v1567 = vunpack.c.h.b16 %v379
      %v1568 = vunpack.c.l.b16 %v380
      %v1569 = vunpack.c.h.b16 %v380
      %v1570 = vunpack.c.l.b16 %v381
      %v1571 = vunpack.c.h.b16 %v381
      %v1572 = vunpack.c.l.b16 %v382
      %v1573 = vunpack.c.h.b16 %v382
      %v1574 = vunpack.c.l.b16 %v383
      %v1575 = vunpack.c.h.b16 %v383
      %v1576 = vunpack.c.l.b16 %v384
      %v1577 = vunpack.c.h.b16 %v384
      %v1578 = vunpack.c.l.b16 %v385
      %v1579 = vunpack.c.h.b16 %v385
      %v1580 = vunpack.c.l.b16 %v386
      %v1581 = vunpack.c.h.b16 %v386
      %v1582 = vunpack.c.l.b16 %v387
      %v1583 = vunpack.c.h.b16 %v387
      %v1584 = vunpack.c.l.b16 %v388
      %v1585 = vunpack.c.h.b16 %v388
      %v1586 = vunpack.c.l.b16 %v389
      %v1587 = vunpack.c.h.b16 %v389
      %v1588 = vunpack.c.l.b16 %v390
      %v1589 = vunpack.c.h.b16 %v390
      %v1590 = vunpack.c.l.b16 %v391
      %v1591 = vunpack.c.h.b16 %v391
      %v1592 = vunpack.c.l.b16 %v392
      %v1593 = vunpack.c.h.b16 %v392
      %v1594 = vunpack.c.l.b16 %v393
      %v1595 = vunpack.c.h.b16 %v393
      %v1596 = vunpack.c.l.b16 %v394
      %v1597 = vunpack.c.h.b16 %v394
      %v1598 = vunpack.c.l.b16 %v395
      %v1599 = vunpack.c.h.b16 %v395
      %v1600 = vunpack.c.l.b16 %v396
      %v1601 = vunpack.c.h.b16 %v396
      %v1602 = vunpack.c.l.b16 %v397
      %v1603 = vunpack.c.h.b16 %v397
      %v1604 = vunpack.c.l.b16 %v398
      %v1605 = vunpack.c.h.b16 %v398
      %v1606 = vunpack.c.l.b16 %v399
      %v1607 = vunpack.c.h.b16 %v399
      %v1608 = vunpack.c.l.b16 %v400
      %v1609 = vunpack.c.h.b16 %v400
      %v1610 = vunpack.c.l.b16 %v401
      %v1611 = vunpack.c.h.b16 %v401
      %v1612 = vunpack.c.l.b16 %v402
      %v1613 = vunpack.c.h.b16 %v402
      %v1614 = vunpack.c.l.b16 %v403
      %v1615 = vunpack.c.h.b16 %v403
      %v1616 = vunpack.c.l.b16 %v404
      %v1617 = vunpack.c.h.b16 %v404
      %v1618 = vunpack.c.l.b16 %v405
      %v1619 = vunpack.c.h.b16 %v405
      %v1620 = vunpack.c.l.b16 %v406
      %v1621 = vunpack.c.h.b16 %v406
      %v1622 = vunpack.c.l.b16 %v407
      %v1623 = vunpack.c.h.b16 %v407
      %v1624 = vunpack.c.l.b16 %v408
      %v1625 = vunpack.c.h.b16 %v408
      %v1626 = vunpack.c.l.b16 %v409
      %v1627 = vunpack.c.h.b16 %v409
      %v1628 = vunpack.c.l.b16 %v410
      %v1629 = vunpack.c.h.b16 %v410
      %v1630 = vunpack.c.l.b16 %v411
      %v1631 = vunpack.c.h.b16 %v411
      %v1632 = vunpack.c.l.b16 %v412
      %v1633 = vunpack.c.h.b16 %v412
      %v1634 = vunpack.c.l.b16 %v413
      %v1635 = vunpack.c.h.b16 %v413
      %v1636 = vunpack.c.l.b16 %v414
      %v1637 = vunpack.c.h.b16 %v414
      %v1638 = vunpack.c.l.b16 %v415
      %v1639 = vunpack.c.h.b16 %v415
      %v1640 = vunpack.c.l.b16 %v416
      %v1641 = vunpack.c.h.b16 %v416
      %v1642 = vunpack.c.l.b16 %v417
      %v1643 = vunpack.c.h.b16 %v417
      %v1644 = vunpack.c.l.b16 %v418
      %v1645 = vunpack.c.h.b16 %v418
      %v1646 = vunpack.c.l.b16 %v419
      %v1647 = vunpack.c.h.b16 %v419
      %v1648 = vunpack.c.l.b16 %v420
      %v1649 = vunpack.c.h.b16 %v420
      %v1650 = vunpack.c.l.b16 %v421
      %v1651 = vunpack.c.h.b16 %v421
      %v1652 = vunpack.c.l.b16 %v422
      %v1653 = vunpack.c.h.b16 %v422
      %v1654 = vunpack.c.l.b16 %v423
      %v1655 = vunpack.c.h.b16 %v423
      %v1656 = vunpack.c.l.b16 %v424
      %v1657 = vunpack.c.h.b16 %v424
      %v1658 = vunpack.c.l.b16 %v425
      %v1659 = vunpack.c.h.b16 %v425
      %v1660 = vunpack.c.l.b16 %v426
      %v1661 = vunpack.c.h.b16 %v426
      %v1662 = vunpack.c.l.b16 %v427
      %v1663 = vunpack.c.h.b16 %v427
      %v1664 = vunpack.c.l.b16 %v428
      %v1665 = vunpack.c.h.b16 %v428
      %v1666 = vunpack.c.l.b16 %v429
      %v1667 = vunpack.c.h.b16 %v429
      %v1668 = vunpack.c.l.b16 %v430
      %v1669 = vunpack.c.h.b16 %v430
      %v1670 = vunpack.c.l.b16 %v431
      %v1671 = vunpack.c.h.b16 %v431
      %v1672 = vunpack.c.l.b16 %v432
      %v1673 = vunpack.c.h.b16 %v432
      %v1674 = vunpack.c.l.b16 %v433
      %v1675 = vunpack.c.h.b16 %v433
      %v1676 = vunpack.c.l.b16 %v434
      %v1677 = vunpack.c.h.b16 %v434
      %v1678 = vunpack.c.l.b16 %v435
      %v1679 = vunpack.c.h.b16 %v435
      %v1680 = vunpack.c.l.b16 %v436
      %v1681 = vunpack.c.h.b16 %v436
      %v1682 = vunpack.c.l.b16 %v437
      %v1683 = vunpack.c.h.b16 %v437
      %v1684 = vunpack.c.l.b16 %v438
      %v1685 = vunpack.c.h.b16 %v438
      %v1686 = vunpack.c.l.b16 %v439
      %v1687 = vunpack.c.h.b16 %v439
      %v1688 = vunpack.c.l.b16 %v440
      %v1689 = vunpack.c.h.b16 %v440
      %v1690 = vunpack.c.l.b16 %v441
      %v1691 = vunpack.c.h.b16 %v441
      %v1692 = vunpack.c.l.b16 %v442
      %v1693 = vunpack.c.h.b16 %v442
      %v1694 = vunpack.c.l.b16 %v443
      %v1695 = vunpack.c.h.b16 %v443
      %v1696 = vunpack.c.l.b16 %v444
      %v1697 = vunpack.c.h.b16 %v444
      %v1698 = vunpack.c.l.b16 %v445
      %v1699 = vunpack.c.h.b16 %v445
      %v1700 = vunpack.c.l.b16 %v446
      %v1701 = vunpack.c.h.b16 %v446
      %v1702 = vunpack.c.l.b16 %v447
      %v1703 = vunpack.c.h.b16 %v447
      %v1704 = vunpack.c.l.b16 %v448
      %v1705 = vunpack.c.h.b16 %v448
      %v1706 = vunpack.c.l.b16 %v449
      %v1707 = vunpack.c.h.b16 %v449
      %v1708 = vunpack.c.l.b16 %v450
      %v1709 = vunpack.c.h.b16 %v450
      %v1710 = vunpack.c.l.b16 %v451
      %v1711 = vunpack.c.h.b16 %v451
      %v1712 = vunpack.c.l.b16 %v452
      %v1713 = vunpack.c.h.b16 %v452
      %v1714 = vunpack.c.l.b16 %v453
      %v1715 = vunpack.c.h.b16 %v453
      %v1716 = vunpack.c.l.b16 %v454
      %v1717 = vunpack.c.h.b16 %v454
      %v1718 = vunpack.c.l.b16 %v455
      %v1719 = vunpack.c.h.b16 %v455
      %v1720 = vunpack.c.l.b16 %v456
      %v1721 = vunpack.c.h.b16 %v456
      %v1722 = vunpack.c.l.b16 %v457
      %v1723 = vunpack.c.h.b16 %v457
      %v1724 = vunpack.c.l.b16 %v458
      %v1725 = vunpack.c.h.b16 %v458
      %v1726 = vunpack.c.l.b16 %v459
      %v1727 = vunpack.c.h.b16 %v459
      %v1728 = vunpack.c.l.b16 %v460
      %v1729 = vunpack.c.h.b16 %v460
      %v1730 = vunpack.c.l.b16 %v461
      %v1731 = vunpack.c.h.b16 %v461
      %v1732 = vunpack.c.l.b16 %v462
      %v1733 = vunpack.c.h.b16 %v462
      %v1734 = vunpack.c.l.b16 %v463
      %v1735 = vunpack.c.h.b16 %v463
      %v1736 = vunpack.c.l.b16 %v464
      %v1737 = vunpack.c.h.b16 %v464
      %v1738 = vunpack.c.l.b16 %v465
      %v1739 = vunpack.c.h.b16 %v465
      %v1740 = vunpack.c.l.b16 %v466
      %v1741 = vunpack.c.h.b16 %v466
      %v1742 = vunpack.c.l.b16 %v467
      %v1743 = vunpack.c.h.b16 %v467
      %v1744 = vunpack.c.l.b16 %v468
      %v1745 = vunpack.c.h.b16 %v468
      %v1746 = vunpack.c.l.b16 %v469
      %v1747 = vunpack.c.h.b16 %v469
      %v1748 = vunpack.c.l.b16 %v470
      %v1749 = vunpack.c.h.b16 %v470
      %v1750 = vunpack.c.l.b16 %v471
      %v1751 = vunpack.c.h.b16 %v471
      %v1752 = vunpack.c.l.b16 %v472
      %v1753 = vunpack.c.h.b16 %v472
      %v1754 = vunpack.c.l.b16 %v473
      %v1755 = vunpack.c.h.b16 %v473
      %v1756 = vunpack.c.l.b16 %v474
      %v1757 = vunpack.c.h.b16 %v474
      %v1758 = vunpack.c.l.b16 %v475
      %v1759 = vunpack.c.h.b16 %v475
      %v1760 = vunpack.c.l.b16 %v476
      %v1761 = vunpack.c.h.b16 %v476
      %v1762 = vunpack.c.l.b16 %v477
      %v1763 = vunpack.c.h.b16 %v477
      %v1764 = vunpack.c.l.b16 %v478
      %v1765 = vunpack.c.h.b16 %v478
      %v1766 = vunpack.c.l.b16 %v479
      %v1767 = vunpack.c.h.b16 %v479
      %v1768 = vunpack.c.l.b16 %v480
      %v1769 = vunpack.c.h.b16 %v480
      %v1770 = vunpack.c.l.b16 %v481
      %v1771 = vunpack.c.h.b16 %v481
      %v1772 = vunpack.c.l.b16 %v482
      %v1773 = vunpack.c.h.b16 %v482
      %v1774 = vunpack.c.l.b16 %v483
      %v1775 = vunpack.c.h.b16 %v483
      %v1776 = vunpack.c.l.b16 %v484
      %v1777 = vunpack.c.h.b16 %v484
      %v1778 = vunpack.c.l.b16 %v485
      %v1779 = vunpack.c.h.b16 %v485
      %v1780 = vunpack.c.l.b16 %v486
      %v1781 = vunpack.c.h.b16 %v486
      %v1782 = vunpack.c.l.b16 %v487
      %v1783 = vunpack.c.h.b16 %v487
      %v1784 = vunpack.c.l.b16 %v488
      %v1785 = vunpack.c.h.b16 %v488
      %v1786 = vunpack.c.l.b16 %v489
      %v1787 = vunpack.c.h.b16 %v489
      %v1788 = vunpack.c.l.b16 %v490
      %v1789 = vunpack.c.h.b16 %v490
      %v1790 = vunpack.c.l.b16 %v491
      %v1791 = vunpack.c.h.b16 %v491
      %v1792 = vunpack.c.l.b16 %v492
      %v1793 = vunpack.c.h.b16 %v492
      %v1794 = vunpack.c.l.b16 %v493
      %v1795 = vunpack.c.h.b16 %v493
      %v1796 = vunpack.c.l.b16 %v494
      %v1797 = vunpack.c.h.b16 %v494
      %v1798 = vunpack.c.l.b16 %v495
      %v1799 = vunpack.c.h.b16 %v495
      %v1800 = vpack.c.b16 %v1552, %v1544
      %v1801 = vpack.c.b16 %v1553, %v1545
      %v1802 = vpack.c.b16 %v1554, %v1546
      %v1803 = vpack.c.b16 %v1555, %v1547
      %v1804 = vpack.c.b16 %v1556, %v1548
      %v1805 = vpack.c.b16 %v1557, %v1549
      %v1806 = vpack.c.b16 %v1558, %v1550
      %v1807 = vpack.c.b16 %v1559, %v1551
      %v1808 = vpack.c.b16 %v1568, %v1560
      %v1809 = vpack.c.b16 %v1569, %v1561
      %v1810 = vpack.c.b16 %v1570, %v1562
      %v1811 = vpack.c.b16 %v1571, %v1563
      %v1812 = vpack.c.b16 %v1572, %v1564
      %v1813 = vpack.c.b16 %v1573, %v1565
      %v1814 = vpack.c.b16 %v1574, %v1566
      %v1815 = vpack.c.b16 %v1575, %v1567
      %v1816 = vpack.c.b16 %v1584, %v1576
      %v1817 = vpack.c.b16 %v1585, %v1577
      %v1818 = vpack.c.b16 %v1586, %v1578
      %v1819 = vpack.c.b16 %v1587, %v1579
      %v1820 = vpack.c.b16 %v1588, %v1580
      %v1821 = vpack.c.b16 %v1589, %v1581
      %v1822 = vpack.c.b16 %v1590, %v1582
      %v1823 = vpack.c.b16 %v1591, %v1583
      %v1824 = vpack.c.b16 %v1600, %v1592
      %v1825 = vpack.c.b16 %v1601, %v1593
      %v1826 = vpack.c.b16 %v1602, %v1594
      %v1827 = vpack.c.b16 %v1603, %v1595
      %v1828 = vpack.c.b16 %v1604, %v1596
      %v1829 = vpack.c.b16 %v1605, %v1597
      %v1830 = vpack.c.b16 %v1606, %v1598
      %v1831 = vpack.c.b16 %v1607, %v1599
      %v1832 = vpack.c.b16 %v1616, %v1608
      %v1833 = vpack.c.b16 %v1617, %v1609
      %v1834 = vpack.c.b16 %v1618, %v1610
      %v1835 = vpack.c.b16 %v1619, %v1611
      %v1836 = vpack.c.b16 %v1620, %v1612
      %v1837 = vpack.c.b16 %v1621, %v1613
      %v1838 = vpack.c.b16 %v1622, %v1614
      %v1839 = vpack.c.b16 %v1623, %v1615
      %v1840 = vpack.c.b16 %v1632, %v1624
      %v1841 = vpack.c.b16 %v1633, %v1625
      %v1842 = vpack.c.b16 %v1634, %v1626
      %v1843 = vpack.c.b16 %v1635, %v1627
      %v1844 = vpack.c.b16 %v1636, %v1628
      %v1845 = vpack.c.b16 %v1637, %v1629
      %v1846 = vpack.c.b16 %v1638, %v1630
      %v1847 = vpack.c.b16 %v1639, %v1631
      %v1848 = vpack.c.b16 %v1648, %v1640
      %v1849 = vpack.c.b16 %v1649, %v1641
      %v1850 = vpack.c.b16 %v1650, %v1642
      %v1851 = vpack.c.b16 %v1651, %v1643
      %v1852 = vpack.c.b16 %v1652, %v1644
      %v1853 = vpack.c.b16 %v1653, %v1645
      %v1854 = vpack.c.b16 %v1654, %v1646
      %v1855 = vpack.c.b16 %v1655, %v1647
      %v1856 = vpack.c.b16 %v1664, %v1656
      %v1857 = vpack.c.b16 %v1665, %v1657
      %v1858 = vpack.c.b16 %v1666, %v1658
      %v1859 = vpack.c.b16 %v1667, %v1659
      %v1860 = vpack.c.b16 %v1668, %v1660
      %v1861 = vpack.c.b16 %v1669, %v1661
      %v1862 = vpack.c.b16 %v1670, %v1662
      %v1863 = vpack.c.b16 %v1671, %v1663
      %v1864 = vpack.c.b16 %v1680, %v1672
      %v1865 = vpack.c.b16 %v1681, %v1673
      %v1866 = vpack.c.b16 %v1682, %v1674
      %v1867 = vpack.c.b16 %v1683, %v1675
      %v1868 = vpack.c.b16 %v1684, %v1676
      %v1869 = vpack.c.b16 %v1685, %v1677
      %v1870 = vpack.c.b16 %v1686, %v1678
      %v1871 = vpack.c.b16 %v1687, %v1679
      %v1872 = vpack.c.b16 %v1696, %v1688
      %v1873 = vpack.c.b16 %v1697, %v1689
      %v1874 = vpack.c.b16 %v1698, %v1690
      %v1875 = vpack.c.b16 %v1699, %v1691
      %v1876 = vpack.c.b16 %v1700, %v1692
      %v1877 = vpack.c.b16 %v1701, %v1693
      %v1878 = vpack.c.b16 %v1702, %v1694
      %v1879 = vpack.c.b16 %v1703, %v1695
      %v1880 = vpack.c.b16 %v1712, %v1704
      %v1881 = vpack.c.b16 %v1713, %v1705
      %v1882 = vpack.c.b16 %v1714, %v1706
      %v1883 = vpack.c.b16 %v1715, %v1707
      %v1884 = vpack.c.b16 %v1716, %v1708
      %v1885 = vpack.c.b16 %v1717, %v1709
      %v1886 = vpack.c.b16 %v1718, %v1710
      %v1887 = vpack.c.b16 %v1719, %v1711
      %v1888 = vpack.c.b16 %v1728, %v1720
      %v1889 = vpack.c.b16 %v1729, %v1721
      %v1890 = vpack.c.b16 %v1730, %v1722
      %v1891 = vpack.c.b16 %v1731, %v1723
      %v1892 = vpack.c.b16 %v1732, %v1724
      %v1893 = vpack.c.b16 %v1733, %v1725
      %v1894 = vpack.c.b16 %v1734, %v1726
      %v1895 = vpack.c.b16 %v1735, %v1727
      %v1896 = vpack.c.b16 %v1744, %v1736
      %v1897 = vpack.c.b16 %v1745, %v1737
      %v1898 = vpack.c.b16 %v1746, %v1738
      %v1899 = vpack.c.b16 %v1747, %v1739
      %v1900 = vpack.c.b16 %v1748, %v1740
      %v1901 = vpack.c.b16 %v1749, %v1741
      %v1902 = vpack.c.b16 %v1750, %v1742
      %v1903 = vpack.c.b16 %v1751, %v1743
      %v1904 = vpack.c.b16 %v1760, %v1752
      %v1905 = vpack.c.b16 %v1761, %v1753
      %v1906 = vpack.c.b16 %v1762, %v1754
      %v1907 = vpack.c.b16 %v1763, %v1755
      %v1908 = vpack.c.b16 %v1764, %v1756
      %v1909 = vpack.c.b16 %v1765, %v1757
      %v1910 = vpack.c.b16 %v1766, %v1758
      %v1911 = vpack.c.b16 %v1767, %v1759
      %v1912 = vpack.c.b16 %v1776, %v1768
      %v1913 = vpack.c.b16 %v1777, %v1769
      %v1914 = vpack.c.b16 %v1778, %v1770
      %v1915 = vpack.c.b16 %v1779, %v1771
      %v1916 = vpack.c.b16 %v1780, %v1772
      %v1917 = vpack.c.b16 %v1781, %v1773
      %v1918 = vpack.c.b16 %v1782, %v1774
      %v1919 = vpack.c.b16 %v1783, %v1775
      %v1920 = vpack.c.b16 %v1792, %v1784
      %v1921 = vpack.c.b16 %v1793, %v1785
      %v1922 = vpack.c.b16 %v1794, %v1786
      %v1923 = vpack.c.b16 %v1795, %v1787
      %v1924 = vpack.c.b16 %v1796, %v1788
      %v1925 = vpack.c.b16 %v1797, %v1789
      %v1926 = vpack.c.b16 %v1798, %v1790
      %v1927 = vpack.c.b16 %v1799, %v1791
      %2056 = vmatprep.subr.bf16.mxu0 %v1857
      %2057 = vmatpush1.bf16.msra.mxu0 %v1856
      %2058 = vmatprep.subr.bf16.mxu0 %v1849
      %2059 = vmatpush1.bf16.msra.mxu0 %v1848
      %2060 = vmatprep.subr.bf16.mxu0 %v1841
      %2061 = vmatpush1.bf16.msra.mxu0 %v1840
      %2062 = vmatprep.subr.bf16.mxu0 %v1833
      %2063 = vmatpush1.bf16.msra.mxu0 %v1832
      %2064 = vmatprep.subr.bf16.mxu0 %v1825
      %2065 = vmatpush1.bf16.msra.mxu0 %v1824
      %2066 = vmatprep.subr.bf16.mxu0 %v1817
      %2067 = vmatpush1.bf16.msra.mxu0 %v1816
      %2068 = vmatprep.subr.bf16.mxu0 %v1809
      %2069 = vmatpush1.bf16.msra.mxu0 %v1808
      %2070 = vmatprep.subr.bf16.mxu0 %v1801
      %2071 = vmatpush1.bf16.msra.mxu0 %v1800
      %2072 = vmatprep.subr.bf16.mxu0 %v1921
      %2073 = vmatpush2.bf16.msra.mxu0 %v1920
      %2074 = vmatprep.subr.bf16.mxu0 %v1913
      %2075 = vmatpush2.bf16.msra.mxu0 %v1912
      %2076 = vmatprep.subr.bf16.mxu0 %v1905
      %2077 = vmatpush2.bf16.msra.mxu0 %v1904
      %2078 = vmatprep.subr.bf16.mxu0 %v1897
      %2079 = vmatpush2.bf16.msra.mxu0 %v1896
      %2080 = vmatprep.subr.bf16.mxu0 %v1889
      %2081 = vmatpush2.bf16.msra.mxu0 %v1888
      %2082 = vmatprep.subr.bf16.mxu0 %v1881
      %2083 = vmatpush2.bf16.msra.mxu0 %v1880
      %2084 = vmatprep.subr.bf16.mxu0 %v1873
      %2085 = vmatpush2.bf16.msra.mxu0 %v1872
      %2086 = vmatprep.subr.bf16.mxu0 %v1865
      %2087 = vmatpush2.bf16.msra.mxu0 %v1864
      %2088 = vmatprep.mubr.bf16.mxu0 %v1415
      %2089 = vmatmul.mubr.bf16.gmra.mxu0 %v1414
      %v2090 = vpop.f32.mrf.mxu0
      %v2091 = vadd.f32 0.0, %v2090
      %v2092 = vpop.f32.mrf.mxu0
      %v2093 = vadd.f32 0.0, %v2092
      %v2094 = vpop.f32.mrf.mxu0
      %v2095 = vpop.f32.mrf.mxu0
      %2096 = vdwg.mxu0
      %2097 = vmatprep.subr.bf16.mxu0 %v1859
      %2098 = vmatpush1.bf16.msra.mxu0 %v1858
      %2099 = vmatprep.subr.bf16.mxu0 %v1851
      %2100 = vmatpush1.bf16.msra.mxu0 %v1850
      %2101 = vmatprep.subr.bf16.mxu0 %v1843
      %2102 = vmatpush1.bf16.msra.mxu0 %v1842
      %2103 = vmatprep.subr.bf16.mxu0 %v1835
      %2104 = vmatpush1.bf16.msra.mxu0 %v1834
      %2105 = vmatprep.subr.bf16.mxu0 %v1827
      %2106 = vmatpush1.bf16.msra.mxu0 %v1826
      %2107 = vmatprep.subr.bf16.mxu0 %v1819
      %2108 = vmatpush1.bf16.msra.mxu0 %v1818
      %2109 = vmatprep.subr.bf16.mxu0 %v1811
      %2110 = vmatpush1.bf16.msra.mxu0 %v1810
      %2111 = vmatprep.subr.bf16.mxu0 %v1803
      %2112 = vmatpush1.bf16.msra.mxu0 %v1802
      %2113 = vmatprep.subr.bf16.mxu0 %v1923
      %2114 = vmatpush2.bf16.msra.mxu0 %v1922
      %2115 = vmatprep.subr.bf16.mxu0 %v1915
      %2116 = vmatpush2.bf16.msra.mxu0 %v1914
      %2117 = vmatprep.subr.bf16.mxu0 %v1907
      %2118 = vmatpush2.bf16.msra.mxu0 %v1906
      %2119 = vmatprep.subr.bf16.mxu0 %v1899
      %2120 = vmatpush2.bf16.msra.mxu0 %v1898
      %2121 = vmatprep.subr.bf16.mxu0 %v1891
      %2122 = vmatpush2.bf16.msra.mxu0 %v1890
      %2123 = vmatprep.subr.bf16.mxu0 %v1883
      %2124 = vmatpush2.bf16.msra.mxu0 %v1882
      %2125 = vmatprep.subr.bf16.mxu0 %v1875
      %2126 = vmatpush2.bf16.msra.mxu0 %v1874
      %2127 = vmatprep.subr.bf16.mxu0 %v1867
      %2128 = vmatpush2.bf16.msra.mxu0 %v1866
      %2129 = vmatprep.mubr.bf16.mxu0 %v1415
      %2130 = vmatmul.mubr.bf16.gmra.mxu0 %v1414
      %v2131 = vpop.f32.mrf.mxu0
      %v2132 = vadd.f32 0.0, %v2131
      %v2133 = vpop.f32.mrf.mxu0
      %v2134 = vadd.f32 0.0, %v2133
      %v2135 = vpop.f32.mrf.mxu0
      %v2136 = vpop.f32.mrf.mxu0
      %2137 = vdwg.mxu0
      %2138 = vmatprep.subr.bf16.mxu0 %v1861
      %2139 = vmatpush1.bf16.msra.mxu0 %v1860
      %2140 = vmatprep.subr.bf16.mxu0 %v1853
      %2141 = vmatpush1.bf16.msra.mxu0 %v1852
      %2142 = vmatprep.subr.bf16.mxu0 %v1845
      %2143 = vmatpush1.bf16.msra.mxu0 %v1844
      %2144 = vmatprep.subr.bf16.mxu0 %v1837
      %2145 = vmatpush1.bf16.msra.mxu0 %v1836
      %2146 = vmatprep.subr.bf16.mxu0 %v1829
      %2147 = vmatpush1.bf16.msra.mxu0 %v1828
      %2148 = vmatprep.subr.bf16.mxu0 %v1821
      %2149 = vmatpush1.bf16.msra.mxu0 %v1820
      %2150 = vmatprep.subr.bf16.mxu0 %v1813
      %2151 = vmatpush1.bf16.msra.mxu0 %v1812
      %2152 = vmatprep.subr.bf16.mxu0 %v1805
      %2153 = vmatpush1.bf16.msra.mxu0 %v1804
      %2154 = vmatprep.subr.bf16.mxu0 %v1925
      %2155 = vmatpush2.bf16.msra.mxu0 %v1924
      %2156 = vmatprep.subr.bf16.mxu0 %v1917
      %2157 = vmatpush2.bf16.msra.mxu0 %v1916
      %2158 = vmatprep.subr.bf16.mxu0 %v1909
      %2159 = vmatpush2.bf16.msra.mxu0 %v1908
      %2160 = vmatprep.subr.bf16.mxu0 %v1901
      %2161 = vmatpush2.bf16.msra.mxu0 %v1900
      %2162 = vmatprep.subr.bf16.mxu0 %v1893
      %2163 = vmatpush2.bf16.msra.mxu0 %v1892
      %2164 = vmatprep.subr.bf16.mxu0 %v1885
      %2165 = vmatpush2.bf16.msra.mxu0 %v1884
      %2166 = vmatprep.subr.bf16.mxu0 %v1877
      %2167 = vmatpush2.bf16.msra.mxu0 %v1876
      %2168 = vmatprep.subr.bf16.mxu0 %v1869
      %2169 = vmatpush2.bf16.msra.mxu0 %v1868
      %2170 = vmatprep.mubr.bf16.mxu0 %v1415
      %2171 = vmatmul.mubr.bf16.gmra.mxu0 %v1414
      %v2172 = vpop.f32.mrf.mxu0
      %v2173 = vadd.f32 0.0, %v2172
      %v2174 = vpop.f32.mrf.mxu0
      %v2175 = vadd.f32 0.0, %v2174
      %v2176 = vpop.f32.mrf.mxu0
      %v2177 = vpop.f32.mrf.mxu0
      %2178 = vdwg.mxu0
      %2179 = vmatprep.subr.bf16.mxu0 %v1863
      %2180 = vmatpush1.bf16.msra.mxu0 %v1862
      %2181 = vmatprep.subr.bf16.mxu0 %v1855
      %2182 = vmatpush1.bf16.msra.mxu0 %v1854
      %2183 = vmatprep.subr.bf16.mxu0 %v1847
      %2184 = vmatpush1.bf16.msra.mxu0 %v1846
      %2185 = vmatprep.subr.bf16.mxu0 %v1839
      %2186 = vmatpush1.bf16.msra.mxu0 %v1838
      %2187 = vmatprep.subr.bf16.mxu0 %v1831
      %2188 = vmatpush1.bf16.msra.mxu0 %v1830
      %2189 = vmatprep.subr.bf16.mxu0 %v1823
      %2190 = vmatpush1.bf16.msra.mxu0 %v1822
      %2191 = vmatprep.subr.bf16.mxu0 %v1815
      %2192 = vmatpush1.bf16.msra.mxu0 %v1814
      %2193 = vmatprep.subr.bf16.mxu0 %v1807
      %2194 = vmatpush1.bf16.msra.mxu0 %v1806
      %2195 = vmatprep.subr.bf16.mxu0 %v1927
      %2196 = vmatpush2.bf16.msra.mxu0 %v1926
      %2197 = vmatprep.subr.bf16.mxu0 %v1919
      %2198 = vmatpush2.bf16.msra.mxu0 %v1918
      %2199 = vmatprep.subr.bf16.mxu0 %v1911
      %2200 = vmatpush2.bf16.msra.mxu0 %v1910
      %2201 = vmatprep.subr.bf16.mxu0 %v1903
      %2202 = vmatpush2.bf16.msra.mxu0 %v1902
      %2203 = vmatprep.subr.bf16.mxu0 %v1895
      %2204 = vmatpush2.bf16.msra.mxu0 %v1894
      %2205 = vmatprep.subr.bf16.mxu0 %v1887
      %2206 = vmatpush2.bf16.msra.mxu0 %v1886
      %2207 = vmatprep.subr.bf16.mxu0 %v1879
      %2208 = vmatpush2.bf16.msra.mxu0 %v1878
      %2209 = vmatprep.subr.bf16.mxu0 %v1871
      %2210 = vmatpush2.bf16.msra.mxu0 %v1870
      %2211 = vmatprep.mubr.bf16.mxu0 %v1415
      %2212 = vmatmul.mubr.bf16.gmra.mxu0 %v1414
      %v2213 = vpop.f32.mrf.mxu0
      %v2214 = vadd.f32 0.0, %v2213
      %v2215 = vpop.f32.mrf.mxu0
      %v2216 = vadd.f32 0.0, %v2215
      %v2217 = vpop.f32.mrf.mxu0
      %v2218 = vpop.f32.mrf.mxu0
      %2219 = vdwg.mxu0
      %v2348 = vunpack.c.l.b16 %v240
      %v2349 = vunpack.c.h.b16 %v240
      %v2350 = vunpack.c.l.b16 %v241
      %v2351 = vunpack.c.h.b16 %v241
      %v2352 = vunpack.c.l.b16 %v242
      %v2353 = vunpack.c.h.b16 %v242
      %v2354 = vunpack.c.l.b16 %v243
      %v2355 = vunpack.c.h.b16 %v243
      %v2356 = vunpack.c.l.b16 %v244
      %v2357 = vunpack.c.h.b16 %v244
      %v2358 = vunpack.c.l.b16 %v245
      %v2359 = vunpack.c.h.b16 %v245
      %v2360 = vunpack.c.l.b16 %v246
      %v2361 = vunpack.c.h.b16 %v246
      %v2362 = vunpack.c.l.b16 %v247
      %v2363 = vunpack.c.h.b16 %v247
      %v2364 = vunpack.c.l.b16 %v248
      %v2365 = vunpack.c.h.b16 %v248
      %v2366 = vunpack.c.l.b16 %v249
      %v2367 = vunpack.c.h.b16 %v249
      %v2368 = vunpack.c.l.b16 %v250
      %v2369 = vunpack.c.h.b16 %v250
      %v2370 = vunpack.c.l.b16 %v251
      %v2371 = vunpack.c.h.b16 %v251
      %v2372 = vunpack.c.l.b16 %v252
      %v2373 = vunpack.c.h.b16 %v252
      %v2374 = vunpack.c.l.b16 %v253
      %v2375 = vunpack.c.h.b16 %v253
      %v2376 = vunpack.c.l.b16 %v254
      %v2377 = vunpack.c.h.b16 %v254
      %v2378 = vunpack.c.l.b16 %v255
      %v2379 = vunpack.c.h.b16 %v255
      %v2380 = vunpack.c.l.b16 %v256
      %v2381 = vunpack.c.h.b16 %v256
      %v2382 = vunpack.c.l.b16 %v257
      %v2383 = vunpack.c.h.b16 %v257
      %v2384 = vunpack.c.l.b16 %v258
      %v2385 = vunpack.c.h.b16 %v258
      %v2386 = vunpack.c.l.b16 %v259
      %v2387 = vunpack.c.h.b16 %v259
      %v2388 = vunpack.c.l.b16 %v260
      %v2389 = vunpack.c.h.b16 %v260
      %v2390 = vunpack.c.l.b16 %v261
      %v2391 = vunpack.c.h.b16 %v261
      %v2392 = vunpack.c.l.b16 %v262
      %v2393 = vunpack.c.h.b16 %v262
      %v2394 = vunpack.c.l.b16 %v263
      %v2395 = vunpack.c.h.b16 %v263
      %v2396 = vunpack.c.l.b16 %v264
      %v2397 = vunpack.c.h.b16 %v264
      %v2398 = vunpack.c.l.b16 %v265
      %v2399 = vunpack.c.h.b16 %v265
      %v2400 = vunpack.c.l.b16 %v266
      %v2401 = vunpack.c.h.b16 %v266
      %v2402 = vunpack.c.l.b16 %v267
      %v2403 = vunpack.c.h.b16 %v267
      %v2404 = vunpack.c.l.b16 %v268
      %v2405 = vunpack.c.h.b16 %v268
      %v2406 = vunpack.c.l.b16 %v269
      %v2407 = vunpack.c.h.b16 %v269
      %v2408 = vunpack.c.l.b16 %v270
      %v2409 = vunpack.c.h.b16 %v270
      %v2410 = vunpack.c.l.b16 %v271
      %v2411 = vunpack.c.h.b16 %v271
      %v2412 = vunpack.c.l.b16 %v272
      %v2413 = vunpack.c.h.b16 %v272
      %v2414 = vunpack.c.l.b16 %v273
      %v2415 = vunpack.c.h.b16 %v273
      %v2416 = vunpack.c.l.b16 %v274
      %v2417 = vunpack.c.h.b16 %v274
      %v2418 = vunpack.c.l.b16 %v275
      %v2419 = vunpack.c.h.b16 %v275
      %v2420 = vunpack.c.l.b16 %v276
      %v2421 = vunpack.c.h.b16 %v276
      %v2422 = vunpack.c.l.b16 %v277
      %v2423 = vunpack.c.h.b16 %v277
      %v2424 = vunpack.c.l.b16 %v278
      %v2425 = vunpack.c.h.b16 %v278
      %v2426 = vunpack.c.l.b16 %v279
      %v2427 = vunpack.c.h.b16 %v279
      %v2428 = vunpack.c.l.b16 %v280
      %v2429 = vunpack.c.h.b16 %v280
      %v2430 = vunpack.c.l.b16 %v281
      %v2431 = vunpack.c.h.b16 %v281
      %v2432 = vunpack.c.l.b16 %v282
      %v2433 = vunpack.c.h.b16 %v282
      %v2434 = vunpack.c.l.b16 %v283
      %v2435 = vunpack.c.h.b16 %v283
      %v2436 = vunpack.c.l.b16 %v284
      %v2437 = vunpack.c.h.b16 %v284
      %v2438 = vunpack.c.l.b16 %v285
      %v2439 = vunpack.c.h.b16 %v285
      %v2440 = vunpack.c.l.b16 %v286
      %v2441 = vunpack.c.h.b16 %v286
      %v2442 = vunpack.c.l.b16 %v287
      %v2443 = vunpack.c.h.b16 %v287
      %v2444 = vunpack.c.l.b16 %v288
      %v2445 = vunpack.c.h.b16 %v288
      %v2446 = vunpack.c.l.b16 %v289
      %v2447 = vunpack.c.h.b16 %v289
      %v2448 = vunpack.c.l.b16 %v290
      %v2449 = vunpack.c.h.b16 %v290
      %v2450 = vunpack.c.l.b16 %v291
      %v2451 = vunpack.c.h.b16 %v291
      %v2452 = vunpack.c.l.b16 %v292
      %v2453 = vunpack.c.h.b16 %v292
      %v2454 = vunpack.c.l.b16 %v293
      %v2455 = vunpack.c.h.b16 %v293
      %v2456 = vunpack.c.l.b16 %v294
      %v2457 = vunpack.c.h.b16 %v294
      %v2458 = vunpack.c.l.b16 %v295
      %v2459 = vunpack.c.h.b16 %v295
      %v2460 = vunpack.c.l.b16 %v296
      %v2461 = vunpack.c.h.b16 %v296
      %v2462 = vunpack.c.l.b16 %v297
      %v2463 = vunpack.c.h.b16 %v297
      %v2464 = vunpack.c.l.b16 %v298
      %v2465 = vunpack.c.h.b16 %v298
      %v2466 = vunpack.c.l.b16 %v299
      %v2467 = vunpack.c.h.b16 %v299
      %v2468 = vunpack.c.l.b16 %v300
      %v2469 = vunpack.c.h.b16 %v300
      %v2470 = vunpack.c.l.b16 %v301
      %v2471 = vunpack.c.h.b16 %v301
      %v2472 = vunpack.c.l.b16 %v302
      %v2473 = vunpack.c.h.b16 %v302
      %v2474 = vunpack.c.l.b16 %v303
      %v2475 = vunpack.c.h.b16 %v303
      %v2476 = vunpack.c.l.b16 %v304
      %v2477 = vunpack.c.h.b16 %v304
      %v2478 = vunpack.c.l.b16 %v305
      %v2479 = vunpack.c.h.b16 %v305
      %v2480 = vunpack.c.l.b16 %v306
      %v2481 = vunpack.c.h.b16 %v306
      %v2482 = vunpack.c.l.b16 %v307
      %v2483 = vunpack.c.h.b16 %v307
      %v2484 = vunpack.c.l.b16 %v308
      %v2485 = vunpack.c.h.b16 %v308
      %v2486 = vunpack.c.l.b16 %v309
      %v2487 = vunpack.c.h.b16 %v309
      %v2488 = vunpack.c.l.b16 %v310
      %v2489 = vunpack.c.h.b16 %v310
      %v2490 = vunpack.c.l.b16 %v311
      %v2491 = vunpack.c.h.b16 %v311
      %v2492 = vunpack.c.l.b16 %v312
      %v2493 = vunpack.c.h.b16 %v312
      %v2494 = vunpack.c.l.b16 %v313
      %v2495 = vunpack.c.h.b16 %v313
      %v2496 = vunpack.c.l.b16 %v314
      %v2497 = vunpack.c.h.b16 %v314
      %v2498 = vunpack.c.l.b16 %v315
      %v2499 = vunpack.c.h.b16 %v315
      %v2500 = vunpack.c.l.b16 %v316
      %v2501 = vunpack.c.h.b16 %v316
      %v2502 = vunpack.c.l.b16 %v317
      %v2503 = vunpack.c.h.b16 %v317
      %v2504 = vunpack.c.l.b16 %v318
      %v2505 = vunpack.c.h.b16 %v318
      %v2506 = vunpack.c.l.b16 %v319
      %v2507 = vunpack.c.h.b16 %v319
      %v2508 = vunpack.c.l.b16 %v320
      %v2509 = vunpack.c.h.b16 %v320
      %v2510 = vunpack.c.l.b16 %v321
      %v2511 = vunpack.c.h.b16 %v321
      %v2512 = vunpack.c.l.b16 %v322
      %v2513 = vunpack.c.h.b16 %v322
      %v2514 = vunpack.c.l.b16 %v323
      %v2515 = vunpack.c.h.b16 %v323
      %v2516 = vunpack.c.l.b16 %v324
      %v2517 = vunpack.c.h.b16 %v324
      %v2518 = vunpack.c.l.b16 %v325
      %v2519 = vunpack.c.h.b16 %v325
      %v2520 = vunpack.c.l.b16 %v326
      %v2521 = vunpack.c.h.b16 %v326
      %v2522 = vunpack.c.l.b16 %v327
      %v2523 = vunpack.c.h.b16 %v327
      %v2524 = vunpack.c.l.b16 %v328
      %v2525 = vunpack.c.h.b16 %v328
      %v2526 = vunpack.c.l.b16 %v329
      %v2527 = vunpack.c.h.b16 %v329
      %v2528 = vunpack.c.l.b16 %v330
      %v2529 = vunpack.c.h.b16 %v330
      %v2530 = vunpack.c.l.b16 %v331
      %v2531 = vunpack.c.h.b16 %v331
      %v2532 = vunpack.c.l.b16 %v332
      %v2533 = vunpack.c.h.b16 %v332
      %v2534 = vunpack.c.l.b16 %v333
      %v2535 = vunpack.c.h.b16 %v333
      %v2536 = vunpack.c.l.b16 %v334
      %v2537 = vunpack.c.h.b16 %v334
      %v2538 = vunpack.c.l.b16 %v335
      %v2539 = vunpack.c.h.b16 %v335
      %v2540 = vunpack.c.l.b16 %v336
      %v2541 = vunpack.c.h.b16 %v336
      %v2542 = vunpack.c.l.b16 %v337
      %v2543 = vunpack.c.h.b16 %v337
      %v2544 = vunpack.c.l.b16 %v338
      %v2545 = vunpack.c.h.b16 %v338
      %v2546 = vunpack.c.l.b16 %v339
      %v2547 = vunpack.c.h.b16 %v339
      %v2548 = vunpack.c.l.b16 %v340
      %v2549 = vunpack.c.h.b16 %v340
      %v2550 = vunpack.c.l.b16 %v341
      %v2551 = vunpack.c.h.b16 %v341
      %v2552 = vunpack.c.l.b16 %v342
      %v2553 = vunpack.c.h.b16 %v342
      %v2554 = vunpack.c.l.b16 %v343
      %v2555 = vunpack.c.h.b16 %v343
      %v2556 = vunpack.c.l.b16 %v344
      %v2557 = vunpack.c.h.b16 %v344
      %v2558 = vunpack.c.l.b16 %v345
      %v2559 = vunpack.c.h.b16 %v345
      %v2560 = vunpack.c.l.b16 %v346
      %v2561 = vunpack.c.h.b16 %v346
      %v2562 = vunpack.c.l.b16 %v347
      %v2563 = vunpack.c.h.b16 %v347
      %v2564 = vunpack.c.l.b16 %v348
      %v2565 = vunpack.c.h.b16 %v348
      %v2566 = vunpack.c.l.b16 %v349
      %v2567 = vunpack.c.h.b16 %v349
      %v2568 = vunpack.c.l.b16 %v350
      %v2569 = vunpack.c.h.b16 %v350
      %v2570 = vunpack.c.l.b16 %v351
      %v2571 = vunpack.c.h.b16 %v351
      %v2572 = vunpack.c.l.b16 %v352
      %v2573 = vunpack.c.h.b16 %v352
      %v2574 = vunpack.c.l.b16 %v353
      %v2575 = vunpack.c.h.b16 %v353
      %v2576 = vunpack.c.l.b16 %v354
      %v2577 = vunpack.c.h.b16 %v354
      %v2578 = vunpack.c.l.b16 %v355
      %v2579 = vunpack.c.h.b16 %v355
      %v2580 = vunpack.c.l.b16 %v356
      %v2581 = vunpack.c.h.b16 %v356
      %v2582 = vunpack.c.l.b16 %v357
      %v2583 = vunpack.c.h.b16 %v357
      %v2584 = vunpack.c.l.b16 %v358
      %v2585 = vunpack.c.h.b16 %v358
      %v2586 = vunpack.c.l.b16 %v359
      %v2587 = vunpack.c.h.b16 %v359
      %v2588 = vunpack.c.l.b16 %v360
      %v2589 = vunpack.c.h.b16 %v360
      %v2590 = vunpack.c.l.b16 %v361
      %v2591 = vunpack.c.h.b16 %v361
      %v2592 = vunpack.c.l.b16 %v362
      %v2593 = vunpack.c.h.b16 %v362
      %v2594 = vunpack.c.l.b16 %v363
      %v2595 = vunpack.c.h.b16 %v363
      %v2596 = vunpack.c.l.b16 %v364
      %v2597 = vunpack.c.h.b16 %v364
      %v2598 = vunpack.c.l.b16 %v365
      %v2599 = vunpack.c.h.b16 %v365
      %v2600 = vunpack.c.l.b16 %v366
      %v2601 = vunpack.c.h.b16 %v366
      %v2602 = vunpack.c.l.b16 %v367
      %v2603 = vunpack.c.h.b16 %v367
      %v2604 = vpack.c.b16 %v2356, %v2348
      %v2605 = vpack.c.b16 %v2357, %v2349
      %v2606 = vpack.c.b16 %v2358, %v2350
      %v2607 = vpack.c.b16 %v2359, %v2351
      %v2608 = vpack.c.b16 %v2360, %v2352
      %v2609 = vpack.c.b16 %v2361, %v2353
      %v2610 = vpack.c.b16 %v2362, %v2354
      %v2611 = vpack.c.b16 %v2363, %v2355
      %v2612 = vpack.c.b16 %v2372, %v2364
      %v2613 = vpack.c.b16 %v2373, %v2365
      %v2614 = vpack.c.b16 %v2374, %v2366
      %v2615 = vpack.c.b16 %v2375, %v2367
      %v2616 = vpack.c.b16 %v2376, %v2368
      %v2617 = vpack.c.b16 %v2377, %v2369
      %v2618 = vpack.c.b16 %v2378, %v2370
      %v2619 = vpack.c.b16 %v2379, %v2371
      %v2620 = vpack.c.b16 %v2388, %v2380
      %v2621 = vpack.c.b16 %v2389, %v2381
      %v2622 = vpack.c.b16 %v2390, %v2382
      %v2623 = vpack.c.b16 %v2391, %v2383
      %v2624 = vpack.c.b16 %v2392, %v2384
      %v2625 = vpack.c.b16 %v2393, %v2385
      %v2626 = vpack.c.b16 %v2394, %v2386
      %v2627 = vpack.c.b16 %v2395, %v2387
      %v2628 = vpack.c.b16 %v2404, %v2396
      %v2629 = vpack.c.b16 %v2405, %v2397
      %v2630 = vpack.c.b16 %v2406, %v2398
      %v2631 = vpack.c.b16 %v2407, %v2399
      %v2632 = vpack.c.b16 %v2408, %v2400
      %v2633 = vpack.c.b16 %v2409, %v2401
      %v2634 = vpack.c.b16 %v2410, %v2402
      %v2635 = vpack.c.b16 %v2411, %v2403
      %v2636 = vpack.c.b16 %v2420, %v2412
      %v2637 = vpack.c.b16 %v2421, %v2413
      %v2638 = vpack.c.b16 %v2422, %v2414
      %v2639 = vpack.c.b16 %v2423, %v2415
      %v2640 = vpack.c.b16 %v2424, %v2416
      %v2641 = vpack.c.b16 %v2425, %v2417
      %v2642 = vpack.c.b16 %v2426, %v2418
      %v2643 = vpack.c.b16 %v2427, %v2419
      %v2644 = vpack.c.b16 %v2436, %v2428
      %v2645 = vpack.c.b16 %v2437, %v2429
      %v2646 = vpack.c.b16 %v2438, %v2430
      %v2647 = vpack.c.b16 %v2439, %v2431
      %v2648 = vpack.c.b16 %v2440, %v2432
      %v2649 = vpack.c.b16 %v2441, %v2433
      %v2650 = vpack.c.b16 %v2442, %v2434
      %v2651 = vpack.c.b16 %v2443, %v2435
      %v2652 = vpack.c.b16 %v2452, %v2444
      %v2653 = vpack.c.b16 %v2453, %v2445
      %v2654 = vpack.c.b16 %v2454, %v2446
      %v2655 = vpack.c.b16 %v2455, %v2447
      %v2656 = vpack.c.b16 %v2456, %v2448
      %v2657 = vpack.c.b16 %v2457, %v2449
      %v2658 = vpack.c.b16 %v2458, %v2450
      %v2659 = vpack.c.b16 %v2459, %v2451
      %v2660 = vpack.c.b16 %v2468, %v2460
      %v2661 = vpack.c.b16 %v2469, %v2461
      %v2662 = vpack.c.b16 %v2470, %v2462
      %v2663 = vpack.c.b16 %v2471, %v2463
      %v2664 = vpack.c.b16 %v2472, %v2464
      %v2665 = vpack.c.b16 %v2473, %v2465
      %v2666 = vpack.c.b16 %v2474, %v2466
      %v2667 = vpack.c.b16 %v2475, %v2467
      %v2668 = vpack.c.b16 %v2484, %v2476
      %v2669 = vpack.c.b16 %v2485, %v2477
      %v2670 = vpack.c.b16 %v2486, %v2478
      %v2671 = vpack.c.b16 %v2487, %v2479
      %v2672 = vpack.c.b16 %v2488, %v2480
      %v2673 = vpack.c.b16 %v2489, %v2481
      %v2674 = vpack.c.b16 %v2490, %v2482
      %v2675 = vpack.c.b16 %v2491, %v2483
      %v2676 = vpack.c.b16 %v2500, %v2492
      %v2677 = vpack.c.b16 %v2501, %v2493
      %v2678 = vpack.c.b16 %v2502, %v2494
      %v2679 = vpack.c.b16 %v2503, %v2495
      %v2680 = vpack.c.b16 %v2504, %v2496
      %v2681 = vpack.c.b16 %v2505, %v2497
      %v2682 = vpack.c.b16 %v2506, %v2498
      %v2683 = vpack.c.b16 %v2507, %v2499
      %v2684 = vpack.c.b16 %v2516, %v2508
      %v2685 = vpack.c.b16 %v2517, %v2509
      %v2686 = vpack.c.b16 %v2518, %v2510
      %v2687 = vpack.c.b16 %v2519, %v2511
      %v2688 = vpack.c.b16 %v2520, %v2512
      %v2689 = vpack.c.b16 %v2521, %v2513
      %v2690 = vpack.c.b16 %v2522, %v2514
      %v2691 = vpack.c.b16 %v2523, %v2515
      %v2692 = vpack.c.b16 %v2532, %v2524
      %v2693 = vpack.c.b16 %v2533, %v2525
      %v2694 = vpack.c.b16 %v2534, %v2526
      %v2695 = vpack.c.b16 %v2535, %v2527
      %v2696 = vpack.c.b16 %v2536, %v2528
      %v2697 = vpack.c.b16 %v2537, %v2529
      %v2698 = vpack.c.b16 %v2538, %v2530
      %v2699 = vpack.c.b16 %v2539, %v2531
      %v2700 = vpack.c.b16 %v2548, %v2540
      %v2701 = vpack.c.b16 %v2549, %v2541
      %v2702 = vpack.c.b16 %v2550, %v2542
      %v2703 = vpack.c.b16 %v2551, %v2543
      %v2704 = vpack.c.b16 %v2552, %v2544
      %v2705 = vpack.c.b16 %v2553, %v2545
      %v2706 = vpack.c.b16 %v2554, %v2546
      %v2707 = vpack.c.b16 %v2555, %v2547
      %v2708 = vpack.c.b16 %v2564, %v2556
      %v2709 = vpack.c.b16 %v2565, %v2557
      %v2710 = vpack.c.b16 %v2566, %v2558
      %v2711 = vpack.c.b16 %v2567, %v2559
      %v2712 = vpack.c.b16 %v2568, %v2560
      %v2713 = vpack.c.b16 %v2569, %v2561
      %v2714 = vpack.c.b16 %v2570, %v2562
      %v2715 = vpack.c.b16 %v2571, %v2563
      %v2716 = vpack.c.b16 %v2580, %v2572
      %v2717 = vpack.c.b16 %v2581, %v2573
      %v2718 = vpack.c.b16 %v2582, %v2574
      %v2719 = vpack.c.b16 %v2583, %v2575
      %v2720 = vpack.c.b16 %v2584, %v2576
      %v2721 = vpack.c.b16 %v2585, %v2577
      %v2722 = vpack.c.b16 %v2586, %v2578
      %v2723 = vpack.c.b16 %v2587, %v2579
      %v2724 = vpack.c.b16 %v2596, %v2588
      %v2725 = vpack.c.b16 %v2597, %v2589
      %v2726 = vpack.c.b16 %v2598, %v2590
      %v2727 = vpack.c.b16 %v2599, %v2591
      %v2728 = vpack.c.b16 %v2600, %v2592
      %v2729 = vpack.c.b16 %v2601, %v2593
      %v2730 = vpack.c.b16 %v2602, %v2594
      %v2731 = vpack.c.b16 %v2603, %v2595
      %2860 = vmatprep.subr.bf16.mxu0 %v2661
      %2861 = vmatpush1.bf16.msra.mxu0 %v2660
      %2862 = vmatprep.subr.bf16.mxu0 %v2653
      %2863 = vmatpush1.bf16.msra.mxu0 %v2652
      %2864 = vmatprep.subr.bf16.mxu0 %v2645
      %2865 = vmatpush1.bf16.msra.mxu0 %v2644
      %2866 = vmatprep.subr.bf16.mxu0 %v2637
      %2867 = vmatpush1.bf16.msra.mxu0 %v2636
      %2868 = vmatprep.subr.bf16.mxu0 %v2629
      %2869 = vmatpush1.bf16.msra.mxu0 %v2628
      %2870 = vmatprep.subr.bf16.mxu0 %v2621
      %2871 = vmatpush1.bf16.msra.mxu0 %v2620
      %2872 = vmatprep.subr.bf16.mxu0 %v2613
      %2873 = vmatpush1.bf16.msra.mxu0 %v2612
      %2874 = vmatprep.subr.bf16.mxu0 %v2605
      %2875 = vmatpush1.bf16.msra.mxu0 %v2604
      %2876 = vmatprep.subr.bf16.mxu0 %v2725
      %2877 = vmatpush2.bf16.msra.mxu0 %v2724
      %2878 = vmatprep.subr.bf16.mxu0 %v2717
      %2879 = vmatpush2.bf16.msra.mxu0 %v2716
      %2880 = vmatprep.subr.bf16.mxu0 %v2709
      %2881 = vmatpush2.bf16.msra.mxu0 %v2708
      %2882 = vmatprep.subr.bf16.mxu0 %v2701
      %2883 = vmatpush2.bf16.msra.mxu0 %v2700
      %2884 = vmatprep.subr.bf16.mxu0 %v2693
      %2885 = vmatpush2.bf16.msra.mxu0 %v2692
      %2886 = vmatprep.subr.bf16.mxu0 %v2685
      %2887 = vmatpush2.bf16.msra.mxu0 %v2684
      %2888 = vmatprep.subr.bf16.mxu0 %v2677
      %2889 = vmatpush2.bf16.msra.mxu0 %v2676
      %2890 = vmatprep.subr.bf16.mxu0 %v2669
      %2891 = vmatpush2.bf16.msra.mxu0 %v2668
      %2892 = vmatprep.mubr.bf16.mxu0 %v1413
      %2893 = vmatmul.mubr.bf16.gmra.mxu0 %v1412
      %v2894 = vpop.f32.mrf.mxu0
      %v2895 = vadd.f32 %v2091, %v2894
      %v2896 = vpop.f32.mrf.mxu0
      %v2897 = vadd.f32 %v2093, %v2896
      %v2898 = vpop.f32.mrf.mxu0
      %v2899 = vpop.f32.mrf.mxu0
      %2900 = vdwg.mxu0
      %2901 = vmatprep.subr.bf16.mxu0 %v2663
      %2902 = vmatpush1.bf16.msra.mxu0 %v2662
      %2903 = vmatprep.subr.bf16.mxu0 %v2655
      %2904 = vmatpush1.bf16.msra.mxu0 %v2654
      %2905 = vmatprep.subr.bf16.mxu0 %v2647
      %2906 = vmatpush1.bf16.msra.mxu0 %v2646
      %2907 = vmatprep.subr.bf16.mxu0 %v2639
      %2908 = vmatpush1.bf16.msra.mxu0 %v2638
      %2909 = vmatprep.subr.bf16.mxu0 %v2631
      %2910 = vmatpush1.bf16.msra.mxu0 %v2630
      %2911 = vmatprep.subr.bf16.mxu0 %v2623
      %2912 = vmatpush1.bf16.msra.mxu0 %v2622
      %2913 = vmatprep.subr.bf16.mxu0 %v2615
      %2914 = vmatpush1.bf16.msra.mxu0 %v2614
      %2915 = vmatprep.subr.bf16.mxu0 %v2607
      %2916 = vmatpush1.bf16.msra.mxu0 %v2606
      %2917 = vmatprep.subr.bf16.mxu0 %v2727
      %2918 = vmatpush2.bf16.msra.mxu0 %v2726
      %2919 = vmatprep.subr.bf16.mxu0 %v2719
      %2920 = vmatpush2.bf16.msra.mxu0 %v2718
      %2921 = vmatprep.subr.bf16.mxu0 %v2711
      %2922 = vmatpush2.bf16.msra.mxu0 %v2710
      %2923 = vmatprep.subr.bf16.mxu0 %v2703
      %2924 = vmatpush2.bf16.msra.mxu0 %v2702
      %2925 = vmatprep.subr.bf16.mxu0 %v2695
      %2926 = vmatpush2.bf16.msra.mxu0 %v2694
      %2927 = vmatprep.subr.bf16.mxu0 %v2687
      %2928 = vmatpush2.bf16.msra.mxu0 %v2686
      %2929 = vmatprep.subr.bf16.mxu0 %v2679
      %2930 = vmatpush2.bf16.msra.mxu0 %v2678
      %2931 = vmatprep.subr.bf16.mxu0 %v2671
      %2932 = vmatpush2.bf16.msra.mxu0 %v2670
      %2933 = vmatprep.mubr.bf16.mxu0 %v1413
      %2934 = vmatmul.mubr.bf16.gmra.mxu0 %v1412
      %v2935 = vpop.f32.mrf.mxu0
      %v2936 = vadd.f32 %v2132, %v2935
      %v2937 = vpop.f32.mrf.mxu0
      %v2938 = vadd.f32 %v2134, %v2937
      %v2939 = vpop.f32.mrf.mxu0
      %v2940 = vpop.f32.mrf.mxu0
      %2941 = vdwg.mxu0
      %2942 = vmatprep.subr.bf16.mxu0 %v2665
      %2943 = vmatpush1.bf16.msra.mxu0 %v2664
      %2944 = vmatprep.subr.bf16.mxu0 %v2657
      %2945 = vmatpush1.bf16.msra.mxu0 %v2656
      %2946 = vmatprep.subr.bf16.mxu0 %v2649
      %2947 = vmatpush1.bf16.msra.mxu0 %v2648
      %2948 = vmatprep.subr.bf16.mxu0 %v2641
      %2949 = vmatpush1.bf16.msra.mxu0 %v2640
      %2950 = vmatprep.subr.bf16.mxu0 %v2633
      %2951 = vmatpush1.bf16.msra.mxu0 %v2632
      %2952 = vmatprep.subr.bf16.mxu0 %v2625
      %2953 = vmatpush1.bf16.msra.mxu0 %v2624
      %2954 = vmatprep.subr.bf16.mxu0 %v2617
      %2955 = vmatpush1.bf16.msra.mxu0 %v2616
      %2956 = vmatprep.subr.bf16.mxu0 %v2609
      %2957 = vmatpush1.bf16.msra.mxu0 %v2608
      %2958 = vmatprep.subr.bf16.mxu0 %v2729
      %2959 = vmatpush2.bf16.msra.mxu0 %v2728
      %2960 = vmatprep.subr.bf16.mxu0 %v2721
      %2961 = vmatpush2.bf16.msra.mxu0 %v2720
      %2962 = vmatprep.subr.bf16.mxu0 %v2713
      %2963 = vmatpush2.bf16.msra.mxu0 %v2712
      %2964 = vmatprep.subr.bf16.mxu0 %v2705
      %2965 = vmatpush2.bf16.msra.mxu0 %v2704
      %2966 = vmatprep.subr.bf16.mxu0 %v2697
      %2967 = vmatpush2.bf16.msra.mxu0 %v2696
      %2968 = vmatprep.subr.bf16.mxu0 %v2689
      %2969 = vmatpush2.bf16.msra.mxu0 %v2688
      %2970 = vmatprep.subr.bf16.mxu0 %v2681
      %2971 = vmatpush2.bf16.msra.mxu0 %v2680
      %2972 = vmatprep.subr.bf16.mxu0 %v2673
      %2973 = vmatpush2.bf16.msra.mxu0 %v2672
      %2974 = vmatprep.mubr.bf16.mxu0 %v1413
      %2975 = vmatmul.mubr.bf16.gmra.mxu0 %v1412
      %v2976 = vpop.f32.mrf.mxu0
      %v2977 = vadd.f32 %v2173, %v2976
      %v2978 = vpop.f32.mrf.mxu0
      %v2979 = vadd.f32 %v2175, %v2978
      %v2980 = vpop.f32.mrf.mxu0
      %v2981 = vpop.f32.mrf.mxu0
      %2982 = vdwg.mxu0
      %2983 = vmatprep.subr.bf16.mxu0 %v2667
      %2984 = vmatpush1.bf16.msra.mxu0 %v2666
      %2985 = vmatprep.subr.bf16.mxu0 %v2659
      %2986 = vmatpush1.bf16.msra.mxu0 %v2658
      %2987 = vmatprep.subr.bf16.mxu0 %v2651
      %2988 = vmatpush1.bf16.msra.mxu0 %v2650
      %2989 = vmatprep.subr.bf16.mxu0 %v2643
      %2990 = vmatpush1.bf16.msra.mxu0 %v2642
      %2991 = vmatprep.subr.bf16.mxu0 %v2635
      %2992 = vmatpush1.bf16.msra.mxu0 %v2634
      %2993 = vmatprep.subr.bf16.mxu0 %v2627
      %2994 = vmatpush1.bf16.msra.mxu0 %v2626
      %2995 = vmatprep.subr.bf16.mxu0 %v2619
      %2996 = vmatpush1.bf16.msra.mxu0 %v2618
      %2997 = vmatprep.subr.bf16.mxu0 %v2611
      %2998 = vmatpush1.bf16.msra.mxu0 %v2610
      %2999 = vmatprep.subr.bf16.mxu0 %v2731
      %3000 = vmatpush2.bf16.msra.mxu0 %v2730
      %3001 = vmatprep.subr.bf16.mxu0 %v2723
      %3002 = vmatpush2.bf16.msra.mxu0 %v2722
      %3003 = vmatprep.subr.bf16.mxu0 %v2715
      %3004 = vmatpush2.bf16.msra.mxu0 %v2714
      %3005 = vmatprep.subr.bf16.mxu0 %v2707
      %3006 = vmatpush2.bf16.msra.mxu0 %v2706
      %3007 = vmatprep.subr.bf16.mxu0 %v2699
      %3008 = vmatpush2.bf16.msra.mxu0 %v2698
      %3009 = vmatprep.subr.bf16.mxu0 %v2691
      %3010 = vmatpush2.bf16.msra.mxu0 %v2690
      %3011 = vmatprep.subr.bf16.mxu0 %v2683
      %3012 = vmatpush2.bf16.msra.mxu0 %v2682
      %3013 = vmatprep.subr.bf16.mxu0 %v2675
      %3014 = vmatpush2.bf16.msra.mxu0 %v2674
      %3015 = vmatprep.mubr.bf16.mxu0 %v1413
      %3016 = vmatmul.mubr.bf16.gmra.mxu0 %v1412
      %v3017 = vpop.f32.mrf.mxu0
      %v3018 = vadd.f32 %v2214, %v3017
      %v3019 = vpop.f32.mrf.mxu0
      %v3020 = vadd.f32 %v2216, %v3019
      %v3021 = vpop.f32.mrf.mxu0
      %v3022 = vpop.f32.mrf.mxu0
      %3023 = vdwg.mxu0
      %v3025 = vlaneseq
      %v3026 = vshrl.u32 %v3025, 7
      %v3027 = vsub.s32 0, %v3026
      %v3028 = vrot.slane %v496, %v3027
      %v3029 = vlaneseq
      %v3030 = vshrl.u32 %v3029, 7
      %v3031 = vsub.s32 1, %v3030
      %v3032 = vrot.slane %v496, %v3031
      %v3033 = vlaneseq
      %v3034 = vshrl.u32 %v3033, 7
      %v3035 = vsub.s32 2, %v3034
      %v3036 = vrot.slane %v496, %v3035
      %v3037 = vlaneseq
      %v3038 = vshrl.u32 %v3037, 7
      %v3039 = vsub.s32 3, %v3038
      %v3040 = vrot.slane %v496, %v3039
      %v3041 = vlaneseq
      %v3042 = vshrl.u32 %v3041, 7
      %v3043 = vsub.s32 4, %v3042
      %v3044 = vrot.slane %v496, %v3043
      %v3045 = vlaneseq
      %v3046 = vshrl.u32 %v3045, 7
      %v3047 = vsub.s32 5, %v3046
      %v3048 = vrot.slane %v496, %v3047
      %v3049 = vlaneseq
      %v3050 = vshrl.u32 %v3049, 7
      %v3051 = vsub.s32 6, %v3050
      %v3052 = vrot.slane %v496, %v3051
      %v3053 = vlaneseq
      %v3054 = vshrl.u32 %v3053, 7
      %v3055 = vsub.s32 7, %v3054
      %v3056 = vrot.slane %v496, %v3055
      %v3065 = vadd.f32 %v2895, %v3028
      %v3066 = vadd.f32 %v2897, %v3032
      %v3067 = vadd.f32 %v2936, %v3036
      %v3068 = vadd.f32 %v2938, %v3040
      %v3069 = vadd.f32 %v2977, %v3044
      %v3070 = vadd.f32 %v2979, %v3048
      %v3071 = vadd.f32 %v3018, %v3052
      %v3072 = vadd.f32 %v3020, %v3056
      %v3073 = vxor.u32 %v3065, 2147483648
      %v3074 = vxor.u32 %v3066, 2147483648
      %v3075 = vxor.u32 %v3067, 2147483648
      %v3076 = vxor.u32 %v3068, 2147483648
      %v3077 = vxor.u32 %v3069, 2147483648
      %v3078 = vxor.u32 %v3070, 2147483648
      %v3079 = vmul.f32 %v3073, 1.442695
      %v3080 = vpow.pop %v3079
      %v3081 = vmul.f32 %v3074, 1.442695
      %v3082 = vpow.pop %v3081
      %v3083 = vmul.f32 %v3075, 1.442695
      %v3084 = vpow.pop %v3083
      %v3085 = vmul.f32 %v3076, 1.442695
      %v3086 = vpow.pop %v3085
      %v3087 = vmul.f32 %v3077, 1.442695
      %v3088 = vpow.pop %v3087
      %v3089 = vmul.f32 %v3078, 1.442695
      %v3090 = vpow.pop %v3089
      %v3091 = vadd.f32 %v3080, 1.0
      %v3092 = vadd.f32 %v3082, 1.0
      %v3093 = vadd.f32 %v3084, 1.0
      %v3094 = vadd.f32 %v3086, 1.0
      %v3095 = vadd.f32 %v3088, 1.0
      %v3096 = vadd.f32 %v3090, 1.0
      %v3097 = vrcp.pop %v3091
      %v3098 = vmul.f32 1.0, %v3097
      %v3099 = vrcp.pop %v3092
      %v3100 = vmul.f32 1.0, %v3099
      %v3101 = vrcp.pop %v3093
      %v3102 = vmul.f32 1.0, %v3101
      %v3103 = vrcp.pop %v3094
      %v3104 = vmul.f32 1.0, %v3103
      %v3105 = vrcp.pop %v3095
      %v3106 = vmul.f32 1.0, %v3105
      %v3107 = vrcp.pop %v3096
      %v3108 = vmul.f32 1.0, %v3107
      %v3109 = vtanh.pop %v3071
      %v3110 = vtanh.pop %v3072
      %v3111 = vmul.f32 %v3102, %v507
      %v3112 = vmul.f32 %v3104, %v508
      %v3113 = vmul.f32 %v3098, %v3109
      %v3114 = vmul.f32 %v3100, %v3110
      %v3115 = vadd.f32 %v3111, %v3113
      %v3116 = vadd.f32 %v3112, %v3114
      %v3117 = vtanh.pop %v3115
      %v3118 = vtanh.pop %v3116
      %v3119 = vmul.f32 %v3106, %v3117
      %v3120 = vmul.f32 %v3108, %v3118
    $region58: #{tpu_custom_call.1} parent=1 // loop_footer
      %s502 = sadd.s32 1, %s498
    $region59: #{tpu_custom_call.1} parent=1 // loop_footer_branch
      %497 = sbr.rel target = $region55
    $region60: #{tpu_custom_call.1} parent=1 // loop_exit
      _
    %v3123 = vcombine.low %v505, %v506
    %v3125 = vunpack.c.l.s4 1983009808
    %v3126 = vunpack.c.0.s8 %v3125
    %v3127 = vlaneseq
    %v3128 = vshrl.u32 %v3127, 7
    %v3129 = vsub.s32 %v3126, %v3128
    %v3130 = vrot.slane %v3123, %v3129
    %3132 = vst [vmem:[#allocation14] sm:$0xf] %v3130
    %v3135 = vcombine.low %v507, %v508
    %v3137 = vunpack.c.l.s4 1983009808
    %v3138 = vunpack.c.0.s8 %v3137
    %v3139 = vlaneseq
    %v3140 = vshrl.u32 %v3139, 7
    %v3141 = vsub.s32 %v3138, %v3140
    %v3142 = vrot.slane %v3135, %v3141
    %3144 = vst [vmem:[#allocation16] sm:$0xf] %v3142
    %v3145 = vpack.c.bf16 %v505, %v505
    %v3146 = vpack.c.bf16 %v506, %v506
    %v3147 = vld [vmem:[#allocation11] sm:$0xf]
    %v3148 = vld [vmem:[#allocation11 + $0x4] sm:$0xf]
    %v3149 = vld [vmem:[#allocation11 + $0x8] sm:$0xf]
    %v3150 = vld [vmem:[#allocation11 + $0xc] sm:$0xf]
    %v3151 = vld [vmem:[#allocation11 + $0x10] sm:$0xf]
    %v3152 = vld [vmem:[#allocation11 + $0x14] sm:$0xf]
    %v3153 = vld [vmem:[#allocation11 + $0x18] sm:$0xf]
    %v3154 = vld [vmem:[#allocation11 + $0x1c] sm:$0xf]
    %v3155 = vld [vmem:[#allocation11 + $0x20] sm:$0xf]
    %v3156 = vld [vmem:[#allocation11 + $0x24] sm:$0xf]
    %v3157 = vld [vmem:[#allocation11 + $0x28] sm:$0xf]
    %v3158 = vld [vmem:[#allocation11 + $0x2c] sm:$0xf]
    %v3159 = vld [vmem:[#allocation11 + $0x30] sm:$0xf]
    %v3160 = vld [vmem:[#allocation11 + $0x34] sm:$0xf]
    %v3161 = vld [vmem:[#allocation11 + $0x38] sm:$0xf]
    %v3162 = vld [vmem:[#allocation11 + $0x3c] sm:$0xf]
    %v3163 = vld [vmem:[#allocation11 + $0x40] sm:$0xf]
    %v3164 = vld [vmem:[#allocation11 + $0x44] sm:$0xf]
    %v3165 = vld [vmem:[#allocation11 + $0x48] sm:$0xf]
    %v3166 = vld [vmem:[#allocation11 + $0x4c] sm:$0xf]
    %v3167 = vld [vmem:[#allocation11 + $0x50] sm:$0xf]
    %v3168 = vld [vmem:[#allocation11 + $0x54] sm:$0xf]
    %v3169 = vld [vmem:[#allocation11 + $0x58] sm:$0xf]
    %v3170 = vld [vmem:[#allocation11 + $0x5c] sm:$0xf]
    %v3171 = vld [vmem:[#allocation11 + $0x60] sm:$0xf]
    %v3172 = vld [vmem:[#allocation11 + $0x64] sm:$0xf]
    %v3173 = vld [vmem:[#allocation11 + $0x68] sm:$0xf]
    %v3174 = vld [vmem:[#allocation11 + $0x6c] sm:$0xf]
    %v3175 = vld [vmem:[#allocation11 + $0x70] sm:$0xf]
    %v3176 = vld [vmem:[#allocation11 + $0x74] sm:$0xf]
    %v3177 = vld [vmem:[#allocation11 + $0x78] sm:$0xf]
    %v3178 = vld [vmem:[#allocation11 + $0x7c] sm:$0xf]
    %v3179 = vld [vmem:[%s6] sm:$0x1]
    %v3181 = vlaneseq
    %v3182 = vshrl.u32 %v3181, 7
    %v3183 = vsub.s32 0, %v3182
    %v3184 = vrot.slane %v3179, %v3183
    %v3218 = vunpack.c.l.b16 %v3147
    %v3219 = vunpack.c.l.b16 %v3148
    %v3220 = vunpack.c.l.b16 %v3149
    %v3221 = vunpack.c.l.b16 %v3150
    %v3222 = vunpack.c.l.b16 %v3151
    %v3223 = vunpack.c.l.b16 %v3152
    %v3224 = vunpack.c.l.b16 %v3153
    %v3225 = vunpack.c.l.b16 %v3154
    %v3226 = vunpack.c.l.b16 %v3155
    %v3227 = vunpack.c.l.b16 %v3156
    %v3228 = vunpack.c.l.b16 %v3157
    %v3229 = vunpack.c.l.b16 %v3158
    %v3230 = vunpack.c.l.b16 %v3159
    %v3231 = vunpack.c.l.b16 %v3160
    %v3232 = vunpack.c.l.b16 %v3161
    %v3233 = vunpack.c.l.b16 %v3162
    %v3234 = vunpack.c.l.b16 %v3163
    %v3235 = vunpack.c.l.b16 %v3164
    %v3236 = vunpack.c.l.b16 %v3165
    %v3237 = vunpack.c.l.b16 %v3166
    %v3238 = vunpack.c.l.b16 %v3167
    %v3239 = vunpack.c.l.b16 %v3168
    %v3240 = vunpack.c.l.b16 %v3169
    %v3241 = vunpack.c.l.b16 %v3170
    %v3242 = vunpack.c.l.b16 %v3171
    %v3243 = vunpack.c.l.b16 %v3172
    %v3244 = vunpack.c.l.b16 %v3173
    %v3245 = vunpack.c.l.b16 %v3174
    %v3246 = vunpack.c.l.b16 %v3175
    %v3247 = vunpack.c.l.b16 %v3176
    %v3248 = vunpack.c.l.b16 %v3177
    %v3249 = vunpack.c.l.b16 %v3178
    %v3250 = vpack.c.b16 %v3219, %v3218
    %v3251 = vpack.c.b16 %v3221, %v3220
    %v3252 = vpack.c.b16 %v3223, %v3222
    %v3253 = vpack.c.b16 %v3225, %v3224
    %v3254 = vpack.c.b16 %v3227, %v3226
    %v3255 = vpack.c.b16 %v3229, %v3228
    %v3256 = vpack.c.b16 %v3231, %v3230
    %v3257 = vpack.c.b16 %v3233, %v3232
    %v3258 = vpack.c.b16 %v3235, %v3234
    %v3259 = vpack.c.b16 %v3237, %v3236
    %v3260 = vpack.c.b16 %v3239, %v3238
    %v3261 = vpack.c.b16 %v3241, %v3240
    %v3262 = vpack.c.b16 %v3243, %v3242
    %v3263 = vpack.c.b16 %v3245, %v3244
    %v3264 = vpack.c.b16 %v3247, %v3246
    %v3265 = vpack.c.b16 %v3249, %v3248
    %3282 = vmatprep.subr.bf16.mxu0 0
    %3283 = vmatpush1.bf16.msra.mxu0 %v3257
    %3284 = vmatprep.subr.bf16.mxu0 0
    %3285 = vmatpush1.bf16.msra.mxu0 %v3256
    %3286 = vmatprep.subr.bf16.mxu0 0
    %3287 = vmatpush1.bf16.msra.mxu0 %v3255
    %3288 = vmatprep.subr.bf16.mxu0 0
    %3289 = vmatpush1.bf16.msra.mxu0 %v3254
    %3290 = vmatprep.subr.bf16.mxu0 0
    %3291 = vmatpush1.bf16.msra.mxu0 %v3253
    %3292 = vmatprep.subr.bf16.mxu0 0
    %3293 = vmatpush1.bf16.msra.mxu0 %v3252
    %3294 = vmatprep.subr.bf16.mxu0 0
    %3295 = vmatpush1.bf16.msra.mxu0 %v3251
    %3296 = vmatprep.subr.bf16.mxu0 0
    %3297 = vmatpush1.bf16.msra.mxu0 %v3250
    %3298 = vmatprep.subr.bf16.mxu0 0
    %3299 = vmatpush2.bf16.msra.mxu0 %v3265
    %3300 = vmatprep.subr.bf16.mxu0 0
    %3301 = vmatpush2.bf16.msra.mxu0 %v3264
    %3302 = vmatprep.subr.bf16.mxu0 0
    %3303 = vmatpush2.bf16.msra.mxu0 %v3263
    %3304 = vmatprep.subr.bf16.mxu0 0
    %3305 = vmatpush2.bf16.msra.mxu0 %v3262
    %3306 = vmatprep.subr.bf16.mxu0 0
    %3307 = vmatpush2.bf16.msra.mxu0 %v3261
    %3308 = vmatprep.subr.bf16.mxu0 0
    %3309 = vmatpush2.bf16.msra.mxu0 %v3260
    %3310 = vmatprep.subr.bf16.mxu0 0
    %3311 = vmatpush2.bf16.msra.mxu0 %v3259
    %3312 = vmatprep.subr.bf16.mxu0 0
    %3313 = vmatpush2.bf16.msra.mxu0 %v3258
    %3314 = vmatprep.mubr.bf16.mxu0 %v3146
    %3315 = vmatmul.mubr.bf16.gmra.mxu0 %v3145
    %v3316 = vpop.f32.mrf.mxu0
    %v3317 = vadd.f32 %v3184, %v3316
    %v3318 = vpop.f32.mrf.mxu0
    %v3319 = vpop.f32.mrf.mxu0
    %v3320 = vpop.f32.mrf.mxu0
    %3321 = vdwg.mxu0
    %3322 = vst [vmem:[#allocation13] sm:$0x3] %v3317
    // Predicated region
    $region61: #{tpu_custom_call.1} parent=1 // pred_check
      _
    $region62: #{tpu_custom_call.1} parent=1 // pred_check_branch
      %3324 = sbr.rel (0) target = $region64
    $region63: #{tpu_custom_call.1} parent=1 // pred_region
      %s3326 = ssub.s32 32, 32
      %3327 = vsyncadd [#allocation4], %s3326
      %s3329 = sshll.u32 [#allocation13], 4
      %s3330 = int_to_ptr.vmem [resolvable:$true] %s3329
      %3332 = dma.vmem_to_hbm [thread:$0]  %s3330, 32, %s7, [#allocation4]
    $region64: #{tpu_custom_call.1} parent=1 // pred_fallthru
      _
    // Predicated region
    $region65: #{tpu_custom_call.1} parent=1 // pred_check
      _
    $region66: #{tpu_custom_call.1} parent=1 // pred_check_branch
      %3334 = sbr.rel (0) target = $region68
    $region67: #{tpu_custom_call.1} parent=1 // pred_region
      %s3336 = ssub.s32 64, 64
      %3337 = vsyncadd [#allocation15], %s3336
      %s3339 = sshll.u32 [#allocation14], 4
      %s3340 = int_to_ptr.vmem [resolvable:$true] %s3339
      %3342 = dma.vmem_to_hbm [thread:$0]  %s3340, 64, %s8, [#allocation15]
    $region68: #{tpu_custom_call.1} parent=1 // pred_fallthru
      _
    // Predicated region
    $region69: #{tpu_custom_call.1} parent=1 // pred_check
      _
    $region70: #{tpu_custom_call.1} parent=1 // pred_check_branch
      %3344 = sbr.rel (0) target = $region72
    $region71: #{tpu_custom_call.1} parent=1 // pred_region
      %s3346 = ssub.s32 64, 64
      %3347 = vsyncadd [#allocation15], %s3346
      %s3349 = sshll.u32 [#allocation16], 4
      %s3350 = int_to_ptr.vmem [resolvable:$true] %s3349
      %3352 = dma.vmem_to_hbm [thread:$0]  %s3350, 64, %s9, [#allocation15]
    $region72: #{tpu_custom_call.1} parent=1 // pred_fallthru
      _
    // Predicated region
    $region73: #{tpu_custom_call.1} parent=1 // pred_check
      _
    $region74: #{tpu_custom_call.1} parent=1 // pred_check_branch
      %3354 = sbr.rel (0) target = $region76
    $region75: #{tpu_custom_call.1} parent=1 // pred_region
      %3355 = dma.done [#allocation4], 32
    $region76: #{tpu_custom_call.1} parent=1 // pred_fallthru
      _
    // Predicated region
    $region77: #{tpu_custom_call.1} parent=1 // pred_check
      _
    $region78: #{tpu_custom_call.1} parent=1 // pred_check_branch
      %3357 = sbr.rel (0) target = $region80
    $region79: #{tpu_custom_call.1} parent=1 // pred_region
      %3358 = dma.done [#allocation15], 64
    $region80: #{tpu_custom_call.1} parent=1 // pred_fallthru
      _
    // Predicated region
    $region81: #{tpu_custom_call.1} parent=1 // pred_check
      _
    $region82: #{tpu_custom_call.1} parent=1 // pred_check_branch
      %3360 = sbr.rel (0) target = $region84
    $region83: #{tpu_custom_call.1} parent=1 // pred_region
      %3361 = dma.done [#allocation15], 64
    $region84: #{tpu_custom_call.1} parent=1 // pred_fallthru
      _
    %3362 = vsyncpa [#allocation3], 1
    %3363 = vsyncpa [#allocation6], 1
    %3364 = vsyncpa [#allocation9], 1
    %3365 = vsyncpa [#allocation12], 1
    %3366 = vsyncpa [#allocation4], 1
    %3367 = vsyncpa [#allocation15], 1

</llo_original>
